<compile_context>
chip_gen: v7x
topology: tpu7x:2x2x1
jax: 0.10.0
libtpu: 0.0.40
codegen_flags: <defaults>
</compile_context>

<pallas_src>
import functools

import jax
import jax.numpy as jnp
from jax.experimental import pallas as pl
from jax.experimental.pallas import tpu as pltpu

EPS = 1e-5


def _round_up(x, m):
    return (x + m - 1) // m * m


def _cdiv(a, b):
    return (a + b - 1) // b


def _pad2(a, rows, cols):
    r, c = a.shape
    return jnp.pad(a, ((0, rows - r), (0, cols - c)))


# -----------------------------------------------------------------------------
# Pass 1: full-K / full-N conv-as-im2col matmul + per-M-tile BN statistics
# -----------------------------------------------------------------------------
def _conv_stats_kernel(a_ref, b_ref, y_ref, psum_ref, psumsq_ref):
    # Single MXU matmul per M tile (full K, full Cout): no k loop, no
    # accumulator scratch; statistics come straight off the f32 result
    # before the bf16 down-cast store.
    acc = jnp.dot(a_ref[...], b_ref[...], preferred_element_type=jnp.float32)
    y_ref[...] = acc.astype(y_ref.dtype)
    psum_ref[...] = jnp.sum(acc, axis=0, keepdims=True).reshape(psum_ref.shape)
    psumsq_ref[...] = jnp.sum(acc * acc, axis=0,
                              keepdims=True).reshape(psumsq_ref.shape)


def matmul_with_stats(a, b, *, tm, vmem_limit_bytes=None):
    """a: (Mp, K) bf16, b: (K, Np) bf16, Np % 128 == 0, Mp % tm == 0.
    Returns (y bf16 (Mp, Np), channel sum (Np,), channel sum-of-squares (Np,))."""
    Mp, K = a.shape
    _, Np = b.shape
    mt = Mp // tm
    cp = dict(dimension_semantics=("parallel",))
    if vmem_limit_bytes is not None:
        cp["vmem_limit_bytes"] = int(vmem_limit_bytes)
    bytes_accessed = Mp * K * 2 + K * Np * 2 + Mp * Np * 2 + 2 * mt * Np * 4
    y, ps, pss = pl.pallas_call(
        _conv_stats_kernel,
        out_shape=(
            jax.ShapeDtypeStruct((Mp, Np), jnp.bfloat16),
            jax.ShapeDtypeStruct((mt, 1, Np), jnp.float32),
            jax.ShapeDtypeStruct((mt, 1, Np), jnp.float32),
        ),
        grid=(mt,),
        in_specs=[
            pl.BlockSpec((tm, K), lambda i: (i, 0)),   # K == full dim (no pad)
            pl.BlockSpec((K, Np), lambda i: (0, 0)),   # weights stay resident
        ],
        out_specs=(
            pl.BlockSpec((tm, Np), lambda i: (i, 0)),
            pl.BlockSpec((1, 1, Np), lambda i: (i, 0, 0)),
            pl.BlockSpec((1, 1, Np), lambda i: (i, 0, 0)),
        ),
        compiler_params=pltpu.CompilerParams(**cp),
        cost_estimate=pl.CostEstimate(flops=2 * Mp * K * Np, transcendentals=0,
                                      bytes_accessed=int(bytes_accessed)),
    )(a, b)
    # Tiny cross-M-tile reduction of the per-tile statistics.
    return y, ps[:, 0, :].sum(axis=0), pss[:, 0, :].sum(axis=0)


# -----------------------------------------------------------------------------
# Pass 2: elementwise BN apply (+ fused residual-with-its-own-BN) (+ ReLU)
# -----------------------------------------------------------------------------
def _bn_act_kernel(y_ref, scale_ref, bias_ref, o_ref, *, apply_relu):
    out = y_ref[...].astype(jnp.float32) * scale_ref[...] + bias_ref[...]
    if apply_relu:
        out = jnp.maximum(out, 0.0)
    o_ref[...] = out.astype(o_ref.dtype)


def _bn_res_act_kernel(y_ref, scale_ref, bias_ref, res_ref, rscale_ref,
                       rbias_ref, o_ref, *, apply_relu):
    out = (y_ref[...].astype(jnp.float32) * scale_ref[...] + bias_ref[...]
           + res_ref[...].astype(jnp.float32) * rscale_ref[...] + rbias_ref[...])
    if apply_relu:
        out = jnp.maximum(out, 0.0)
    o_ref[...] = out.astype(o_ref.dtype)


def _grow_tm(Mp, tm, cap=1024):
    # Pass 2 is pure HBM-bound elementwise work; grow the tile (amortizes the
    # fixed ~0.35us/grid-step overhead) but keep >= 2 tiles for megacore.
    t = tm
    while t * 2 <= cap and Mp % (t * 2) == 0 and Mp // (t * 2) >= 2:
        t *= 2
    return t


def bn_apply(y, scale, bias, *, residual=None, res_scale=None, res_bias=None,
             apply_relu, tm, out_dtype):
    """y: (Mp, Np) bf16, scale/bias: (Np,) f32, residual: (Mp, Np) bf16 or None."""
    Mp, Np = y.shape
    tm = _grow_tm(Mp, tm)
    grid = (Mp // tm,)
    row = lambda v: v.reshape(1, Np).astype(jnp.float32)
    in_specs = [
        pl.BlockSpec((tm, Np), lambda i: (i, 0)),
        pl.BlockSpec((1, Np), lambda i: (0, 0)),
        pl.BlockSpec((1, Np), lambda i: (0, 0)),
    ]
    args = [y, row(scale), row(bias)]
    if residual is not None:
        in_specs += [
            pl.BlockSpec((tm, Np), lambda i: (i, 0)),
            pl.BlockSpec((1, Np), lambda i: (0, 0)),
            pl.BlockSpec((1, Np), lambda i: (0, 0)),
        ]
        args += [residual, row(res_scale), row(res_bias)]
        kernel = functools.partial(_bn_res_act_kernel, apply_relu=apply_relu)
    else:
        kernel = functools.partial(_bn_act_kernel, apply_relu=apply_relu)
    return pl.pallas_call(
        kernel,
        out_shape=jax.ShapeDtypeStruct((Mp, Np), out_dtype),
        grid=grid,
        in_specs=in_specs,
        out_specs=pl.BlockSpec((tm, Np), lambda i: (i, 0)),
        compiler_params=pltpu.CompilerParams(
            dimension_semantics=("parallel",)),
    )(*args)


# -----------------------------------------------------------------------------
# conv (im2col matmul) + training-mode BatchNorm statistics
# -----------------------------------------------------------------------------
def _choose_tm(M, K, Np, budget=48 * 1024 * 1024):
    # <= 512 rows per tile (fits v7x's 32 MiB scoped default for big layers),
    # >= 2 tiles when M allows so both v7x TensorCores get work; 16-row
    # granularity keeps bf16 sublane tiling clean.
    tm = min(512, max(16, _round_up(_cdiv(M, 2), 16)))

    def est(t):  # double-buffered bf16 LHS / RHS / out + tiny f32 stat tiles
        return 2 * (t * K * 2 + K * Np * 2 + t * Np * 2) + 4 * Np * 4

    while tm > 16 and est(tm) > budget:
        tm = max(16, _round_up(tm // 2, 16))
    return tm, est(tm)


def conv_stats(patches, w_mat, gamma, beta):
    """patches: (M, K), w_mat: (K, Cout).
    Returns (y bf16 (Mpad, Npad), scale (Npad,), bias (Npad,), Mpad, Npad, tm)."""
    M, K = patches.shape
    Cout = w_mat.shape[1]
    Np = _round_up(Cout, 128)                 # lane-dense output channels
    tm, est = _choose_tm(M, K, Np)
    Mpad = _round_up(M, tm)

    a = _pad2(patches.astype(jnp.bfloat16), Mpad, K)
    b = _pad2(w_mat.astype(jnp.bfloat16), K, Np)

    vmem_limit = None
    if est > 12 * 1024 * 1024:
        # default scoped VMEM: 16 MiB (v5e) / 32 MiB (v6e, v7x) — raise it,
        # but stay well under v7x's 64 MiB physical cap.
        vmem_limit = int(min(max(2 * est, 32 * 1024 * 1024), 56 * 1024 * 1024))

    y, s, ss = matmul_with_stats(a, b, tm=tm, vmem_limit_bytes=vmem_limit)

    # Global batch statistics over the TRUE M rows (padded rows are all-zero
    # patches and contribute nothing to the sums).
    inv_m = 1.0 / float(M)
    mean = s * inv_m
    # TODO(synk): E[x^2]-E[x]^2 can cancel for |mean| >> std over large M;
    #             switch to a centered second pass if BN accuracy matters.
    var = jnp.maximum(ss * inv_m - mean * mean, 0.0)
    gamma_p = jnp.pad(gamma.astype(jnp.float32), (0, Np - Cout))
    beta_p = jnp.pad(beta.astype(jnp.float32), (0, Np - Cout))
    scale = gamma_p * jax.lax.rsqrt(var + EPS)
    bias = beta_p - mean * scale
    return y, scale, bias, Mpad, Np, tm


# -----------------------------------------------------------------------------
# Glue: im2col and weight reshaping (plain JAX)
# -----------------------------------------------------------------------------
def im2col_3x3(x, stride):
    """x: (N, H, W, C) NHWC, kernel=3, padding=1. Returns (N*Ho*Wo, 9*C), Ho, Wo."""
    N, H, W, C = x.shape
    xp = jnp.pad(x, ((0, 0), (1, 1), (1, 1), (0, 0)))
    Ho = (H + 2 - 3) // stride + 1
    Wo = (W + 2 - 3) // stride + 1
    cols = []
    for kh in range(3):
        for kw in range(3):
            cols.append(
                xp[:, kh:kh + (Ho - 1) * stride + 1:stride,
                      kw:kw + (Wo - 1) * stride + 1:stride, :]
            )
    patches = jnp.concatenate(cols, axis=-1)  # (N, Ho, Wo, 9*C), (kh, kw, c)
    return patches.reshape(N * Ho * Wo, 9 * C), Ho, Wo


def _w3x3_to_mat(w):  # torch layout (Cout, Cin, 3, 3) -> (9*Cin, Cout)
    cout, cin = w.shape[0], w.shape[1]
    return jnp.transpose(w, (2, 3, 1, 0)).reshape(9 * cin, cout)


def _w1x1_to_mat(w):  # (Cout, Cin, 1, 1) -> (Cin, Cout)
    cout, cin = w.shape[0], w.shape[1]
    return jnp.transpose(w, (2, 3, 1, 0)).reshape(cin, cout)


# -----------------------------------------------------------------------------
# BasicBlock forward
# -----------------------------------------------------------------------------
def basic_block_forward(x_nchw, params, stride, expansion):
    # bf16 activations: the 9x-inflated im2col patches land in HBM as bf16.
    x = jnp.transpose(x_nchw, (0, 2, 3, 1)).astype(jnp.bfloat16)  # NHWC
    N, H, W, Cin = x.shape
    planes = params["w1"].shape[0]
    out_planes = expansion * planes
    # TODO(synk): like the PyTorch module, the residual add only type-checks
    #             for expansion == 1 (conv2 emits `planes` channels).

    # conv1 (3x3, stride) + bn1 + relu; bf16 output feeds conv2's im2col.
    p1, Ho, Wo = im2col_3x3(x, stride)
    M = N * Ho * Wo
    y1, s1, b1, _, _, tm1 = conv_stats(p1, _w3x3_to_mat(params["w1"]),
                                       params["g1"], params["b1"])
    out1 = bn_apply(y1, s1, b1, apply_relu=True, tm=tm1, out_dtype=jnp.bfloat16)
    out1 = out1[:M, :planes].reshape(N, Ho, Wo, planes)
    # TODO(synk): fuse conv1-output tiles directly as halo'd conv2 input tiles
    #             to avoid the full intermediate HBM round trip.

    # conv2 (3x3, stride 1): matmul + stats; its BN, the shortcut (with its
    # own folded BN) and the final ReLU all land in one fused pass 2.
    p2, _, _ = im2col_3x3(out1, 1)
    y2, s2, b2, Mpad2, Np2, tm2 = conv_stats(p2, _w3x3_to_mat(params["w2"]),
                                             params["g2"], params["b2"])

    if stride != 1 or Cin != out_planes:
        # Projection shortcut: keep the un-normalized 1x1-conv output in bf16
        # and fold its BatchNorm into conv2's elementwise pass.
        xs = x[:, ::stride, ::stride, :].reshape(M, Cin)
        ysc, ssc, bsc, Mpad_sc, Np_sc, _ = conv_stats(
            xs, _w1x1_to_mat(params["wsc"]), params["gsc"], params["bsc"])
        if (Mpad_sc, Np_sc) == (Mpad2, Np2):
            res_p, rs_p, rb_p = ysc, ssc, bsc
        else:
            res_p = _pad2(ysc[:M, :out_planes], Mpad2, Np2)
            rs_p = jnp.pad(ssc[:out_planes], (0, Np2 - out_planes))
            rb_p = jnp.pad(bsc[:out_planes], (0, Np2 - out_planes))
    else:
        # Identity shortcut: residual is x itself (bf16), scale=1 / bias=0.
        res_p = _pad2(x.reshape(M, Cin), Mpad2, Np2)
        rs_p = jnp.pad(jnp.ones((Cin,), jnp.float32), (0, Np2 - Cin))
        rb_p = jnp.zeros((Np2,), jnp.float32)

    out = bn_apply(y2, s2, b2, residual=res_p, res_scale=rs_p, res_bias=rb_p,
                   apply_relu=True, tm=tm2, out_dtype=jnp.float32)
    out = out[:M, :planes].reshape(N, Ho, Wo, planes)
    return jnp.transpose(out, (0, 3, 1, 2))  # back to NCHW


# -----------------------------------------------------------------------------
# Pure-JAX f32 reference (lax.conv) for correctness check
# -----------------------------------------------------------------------------
def ref_forward(x, params, stride, expansion):
    def conv3(x, w, s):
        return jax.lax.conv_general_dilated(
            x, w, (s, s), padding=((1, 1), (1, 1)),
            dimension_numbers=("NCHW", "OIHW", "NCHW"))

    def conv1(x, w, s):
        return jax.lax.conv_general_dilated(
            x, w, (s, s), padding="VALID",
            dimension_numbers=("NCHW", "OIHW", "NCHW"))

    def bn(y, g, b):
        mean = jnp.mean(y, axis=(0, 2, 3), keepdims=True)
        var = jnp.mean((y - mean) ** 2, axis=(0, 2, 3), keepdims=True)
        return ((y - mean) * jax.lax.rsqrt(var + EPS)
                * g.reshape(1, -1, 1, 1) + b.reshape(1, -1, 1, 1))

    planes = params["w1"].shape[0]
    out = jax.nn.relu(bn(conv3(x, params["w1"], stride), params["g1"], params["b1"]))
    out = bn(conv3(out, params["w2"], 1), params["g2"], params["b2"])
    if stride != 1 or x.shape[1] != expansion * planes:
        sc = bn(conv1(x, params["wsc"], stride), params["gsc"], params["bsc"])
    else:
        sc = x
    return jax.nn.relu(out + sc)


def make_params(key, in_planes, planes, expansion, with_shortcut):
    ks = jax.random.split(key, 9)
    p = {
        "w1": jax.random.normal(ks[0], (planes, in_planes, 3, 3), jnp.float32) * 0.1,
        "g1": 1.0 + 0.1 * jax.random.normal(ks[1], (planes,), jnp.float32),
        "b1": 0.1 * jax.random.normal(ks[2], (planes,), jnp.float32),
        "w2": jax.random.normal(ks[3], (planes, planes, 3, 3), jnp.float32) * 0.1,
        "g2": 1.0 + 0.1 * jax.random.normal(ks[4], (planes,), jnp.float32),
        "b2": 0.1 * jax.random.normal(ks[5], (planes,), jnp.float32),
    }
    if with_shortcut:
        p["wsc"] = jax.random.normal(
            ks[6], (expansion * planes, in_planes, 1, 1), jnp.float32) * 0.1
        p["gsc"] = 1.0 + 0.1 * jax.random.normal(ks[7], (expansion * planes,), jnp.float32)
        p["bsc"] = 0.1 * jax.random.normal(ks[8], (expansion * planes,), jnp.float32)
    return p


# -----------------------------------------------------------------------------
if __name__ == "__main__":
    key = jax.random.PRNGKey(0)
    configs = [
        # (batch, in_planes, planes, expansion, stride, H) -> projection shortcut
        (2, 4, 8, 1, 2, 16),
        # identity shortcut path
        (2, 8, 8, 1, 1, 16),
    ]
    for ci, (N, in_planes, planes, expansion, stride, H) in enumerate(configs):
        kp, kx, key = jax.random.split(key, 3)
        with_sc = (stride != 1) or (in_planes != expansion * planes)
        params = make_params(kp, in_planes, planes, expansion, with_sc)
        x = jax.random.normal(kx, (N, in_planes, H, H), jnp.float32)

        fwd = jax.jit(functools.partial(basic_block_forward,
                                        stride=stride, expansion=expansion))
        out = jax.block_until_ready(fwd(x, params))
        ref = ref_forward(x, params, stride, expansion)

        assert out.shape == ref.shape == (N, expansion * planes,
                                          H // stride, H // stride), out.shape
        # bf16 MXU operands + bf16 intermediates vs f32 reference.
        max_err = float(jnp.max(jnp.abs(out - ref)))
        mean_err = float(jnp.mean(jnp.abs(out - ref)))
        assert jnp.allclose(out, ref, rtol=5e-2, atol=8e-2), (ci, max_err)
        assert mean_err < 1.5e-2, (ci, mean_err)

    print("KERNEL_OK")
</pallas_src>

<mosaic_0001>
module attributes {stable_mosaic.version = 11 : i64} {
  func.func @_conv_stats_kernel(%arg0: i32, %arg1: memref<64x36xbf16, #tpu.memory_space<vmem>>, %arg2: memref<36x128xbf16, #tpu.memory_space<vmem>>, %arg3: memref<64x128xbf16, #tpu.memory_space<vmem>>, %arg4: memref<1x1x128xf32, #tpu.memory_space<vmem>>, %arg5: memref<1x1x128xf32, #tpu.memory_space<vmem>>) attributes {dimension_semantics = [#tpu.dimension_semantics<parallel>], iteration_bounds = array<i64: 2>, scalar_prefetch = 0 : i64, scratch_operands = 0 : i64, tpu.core_type = #tpu.core_type<tc>, window_params = [{transform_indices = @transform_0, window_bounds = array<i64: 64, 36>}, {pipeline_mode = #tpu.pipeline_mode<synchronous>, transform_indices = @transform_1, window_bounds = array<i64: 36, 128>}, {transform_indices = @transform_2, window_bounds = array<i64: 64, 128>}, {transform_indices = @transform_3, window_bounds = array<i64: 1, 1, 128>}, {transform_indices = @transform_4, window_bounds = array<i64: 1, 1, 128>}]} {
    %c0 = arith.constant 0 : index
    %c0_0 = arith.constant 0 : index
    %0 = vector.load %arg1[%c0, %c0_0] : memref<64x36xbf16, #tpu.memory_space<vmem>>, vector<64x36xbf16>
    %c0_1 = arith.constant 0 : index
    %c0_2 = arith.constant 0 : index
    %1 = vector.load %arg2[%c0_1, %c0_2] : memref<36x128xbf16, #tpu.memory_space<vmem>>, vector<36x128xbf16>
    %cst = arith.constant dense<0.000000e+00> : vector<64x128xf32>
    %2 = tpu.matmul %0, %1, %cst {dimension_numbers = #tpu.dot_dimension_numbers<[1], [0], [0], [1], [0, 0, 1, 1], [], []>} : vector<64x36xbf16>, vector<36x128xbf16>, vector<64x128xf32> -> vector<64x128xf32>
    %3 = arith.truncf %2 : vector<64x128xf32> to vector<64x128xbf16>
    %c0_3 = arith.constant 0 : index
    %c0_4 = arith.constant 0 : index
    %4 = vector.load %arg3[%c0_3, %c0_4] : memref<64x128xbf16, #tpu.memory_space<vmem>>, vector<64x128xbf16>
    tpu.vector_store %arg3[%c0_3, %c0_4], %3 {strides = array<i32>} : memref<64x128xbf16, #tpu.memory_space<vmem>>, vector<64x128xbf16>,
    %cst_5 = arith.constant dense<0.000000e+00> : vector<128xf32>
    %5 = vector.multi_reduction <add>, %2, %cst_5 [0] : vector<64x128xf32> to vector<128xf32>
    %6 = vector.shape_cast %5 : vector<128xf32> to vector<1x128xf32>
    %7 = vector.shape_cast %6 : vector<1x128xf32> to vector<1x1x128xf32>
    %c0_6 = arith.constant 0 : index
    %c0_7 = arith.constant 0 : index
    %c0_8 = arith.constant 0 : index
    %8 = vector.load %arg4[%c0_6, %c0_7, %c0_8] : memref<1x1x128xf32, #tpu.memory_space<vmem>>, vector<1x1x128xf32>
    tpu.vector_store %arg4[%c0_6, %c0_7, %c0_8], %7 {strides = array<i32>} : memref<1x1x128xf32, #tpu.memory_space<vmem>>, vector<1x1x128xf32>,
    %9 = arith.mulf %2, %2 : vector<64x128xf32>
    %cst_9 = arith.constant dense<0.000000e+00> : vector<128xf32>
    %10 = vector.multi_reduction <add>, %9, %cst_9 [0] : vector<64x128xf32> to vector<128xf32>
    %11 = vector.shape_cast %10 : vector<128xf32> to vector<1x128xf32>
    %12 = vector.shape_cast %11 : vector<1x128xf32> to vector<1x1x128xf32>
    %c0_10 = arith.constant 0 : index
    %c0_11 = arith.constant 0 : index
    %c0_12 = arith.constant 0 : index
    %13 = vector.load %arg5[%c0_10, %c0_11, %c0_12] : memref<1x1x128xf32, #tpu.memory_space<vmem>>, vector<1x1x128xf32>
    tpu.vector_store %arg5[%c0_10, %c0_11, %c0_12], %12 {strides = array<i32>} : memref<1x1x128xf32, #tpu.memory_space<vmem>>, vector<1x1x128xf32>,
    return
  }
  func.func @transform_0(%arg0: i32) -> (i32, i32) {
    %c0_i32 = arith.constant 0 : i32
    %c0_i32_0 = arith.constant 0 : i32
    return %arg0, %c0_i32 : i32, i32
  }
  func.func @transform_1(%arg0: i32) -> (i32, i32) {
    %c0_i32 = arith.constant 0 : i32
    %c0_i32_0 = arith.constant 0 : i32
    %c0_i32_1 = arith.constant 0 : i32
    return %c0_i32, %c0_i32_0 : i32, i32
  }
  func.func @transform_2(%arg0: i32) -> (i32, i32) {
    %c0_i32 = arith.constant 0 : i32
    %c0_i32_0 = arith.constant 0 : i32
    return %arg0, %c0_i32 : i32, i32
  }
  func.func @transform_3(%arg0: i32) -> (i32, i32, i32) {
    %c0_i32 = arith.constant 0 : i32
    %c0_i32_0 = arith.constant 0 : i32
    %c0_i32_1 = arith.constant 0 : i32
    return %arg0, %c0_i32, %c0_i32_0 : i32, i32, i32
  }
  func.func @transform_4(%arg0: i32) -> (i32, i32, i32) {
    %c0_i32 = arith.constant 0 : i32
    %c0_i32_0 = arith.constant 0 : i32
    %c0_i32_1 = arith.constant 0 : i32
    return %arg0, %c0_i32, %c0_i32_0 : i32, i32, i32
  }
}

module attributes {stable_mosaic.version = 11 : i64} {
  func.func @_bn_act_kernel(%arg0: i32, %arg1: memref<64x128xbf16, #tpu.memory_space<vmem>>, %arg2: memref<1x128xf32, #tpu.memory_space<vmem>>, %arg3: memref<1x128xf32, #tpu.memory_space<vmem>>, %arg4: memref<64x128xbf16, #tpu.memory_space<vmem>>) attributes {dimension_semantics = [#tpu.dimension_semantics<parallel>], iteration_bounds = array<i64: 2>, scalar_prefetch = 0 : i64, scratch_operands = 0 : i64, tpu.core_type = #tpu.core_type<tc>, window_params = [{transform_indices = @transform_0, window_bounds = array<i64: 64, 128>}, {pipeline_mode = #tpu.pipeline_mode<synchronous>, transform_indices = @transform_1, window_bounds = array<i64: 1, 128>}, {pipeline_mode = #tpu.pipeline_mode<synchronous>, transform_indices = @transform_2, window_bounds = array<i64: 1, 128>}, {transform_indices = @transform_3, window_bounds = array<i64: 64, 128>}]} {
    %c0 = arith.constant 0 : index
    %c0_0 = arith.constant 0 : index
    %0 = vector.load %arg1[%c0, %c0_0] : memref<64x128xbf16, #tpu.memory_space<vmem>>, vector<64x128xbf16>
    %1 = arith.extf %0 : vector<64x128xbf16> to vector<64x128xf32>
    %c0_1 = arith.constant 0 : index
    %c0_2 = arith.constant 0 : index
    %2 = vector.load %arg2[%c0_1, %c0_2] : memref<1x128xf32, #tpu.memory_space<vmem>>, vector<1x128xf32>
    %3 = vector.broadcast %2 : vector<1x128xf32> to vector<64x128xf32>
    %4 = arith.mulf %1, %3 : vector<64x128xf32>
    %c0_3 = arith.constant 0 : index
    %c0_4 = arith.constant 0 : index
    %5 = vector.load %arg3[%c0_3, %c0_4] : memref<1x128xf32, #tpu.memory_space<vmem>>, vector<1x128xf32>
    %6 = vector.broadcast %5 : vector<1x128xf32> to vector<64x128xf32>
    %7 = arith.addf %4, %6 : vector<64x128xf32>
    %cst = arith.constant 0.000000e+00 : f32
    %8 = vector.broadcast %cst : f32 to vector<64x128xf32>
    %9 = arith.maximumf %7, %8 : vector<64x128xf32>
    %10 = arith.truncf %9 : vector<64x128xf32> to vector<64x128xbf16>
    %c0_5 = arith.constant 0 : index
    %c0_6 = arith.constant 0 : index
    %11 = vector.load %arg4[%c0_5, %c0_6] : memref<64x128xbf16, #tpu.memory_space<vmem>>, vector<64x128xbf16>
    tpu.vector_store %arg4[%c0_5, %c0_6], %10 {strides = array<i32>} : memref<64x128xbf16, #tpu.memory_space<vmem>>, vector<64x128xbf16>,
    return
  }
  func.func @transform_0(%arg0: i32) -> (i32, i32) {
    %c0_i32 = arith.constant 0 : i32
    %c0_i32_0 = arith.constant 0 : i32
    return %arg0, %c0_i32 : i32, i32
  }
  func.func @transform_1(%arg0: i32) -> (i32, i32) {
    %c0_i32 = arith.constant 0 : i32
    %c0_i32_0 = arith.constant 0 : i32
    %c0_i32_1 = arith.constant 0 : i32
    return %c0_i32, %c0_i32_0 : i32, i32
  }
  func.func @transform_2(%arg0: i32) -> (i32, i32) {
    %c0_i32 = arith.constant 0 : i32
    %c0_i32_0 = arith.constant 0 : i32
    %c0_i32_1 = arith.constant 0 : i32
    return %c0_i32, %c0_i32_0 : i32, i32
  }
  func.func @transform_3(%arg0: i32) -> (i32, i32) {
    %c0_i32 = arith.constant 0 : i32
    %c0_i32_0 = arith.constant 0 : i32
    return %arg0, %c0_i32 : i32, i32
  }
}

module attributes {stable_mosaic.version = 11 : i64} {
  func.func @_conv_stats_kernel(%arg0: i32, %arg1: memref<64x72xbf16, #tpu.memory_space<vmem>>, %arg2: memref<72x128xbf16, #tpu.memory_space<vmem>>, %arg3: memref<64x128xbf16, #tpu.memory_space<vmem>>, %arg4: memref<1x1x128xf32, #tpu.memory_space<vmem>>, %arg5: memref<1x1x128xf32, #tpu.memory_space<vmem>>) attributes {dimension_semantics = [#tpu.dimension_semantics<parallel>], iteration_bounds = array<i64: 2>, scalar_prefetch = 0 : i64, scratch_operands = 0 : i64, tpu.core_type = #tpu.core_type<tc>, window_params = [{transform_indices = @transform_0, window_bounds = array<i64: 64, 72>}, {pipeline_mode = #tpu.pipeline_mode<synchronous>, transform_indices = @transform_1, window_bounds = array<i64: 72, 128>}, {transform_indices = @transform_2, window_bounds = array<i64: 64, 128>}, {transform_indices = @transform_3, window_bounds = array<i64: 1, 1, 128>}, {transform_indices = @transform_4, window_bounds = array<i64: 1, 1, 128>}]} {
    %c0 = arith.constant 0 : index
    %c0_0 = arith.constant 0 : index
    %0 = vector.load %arg1[%c0, %c0_0] : memref<64x72xbf16, #tpu.memory_space<vmem>>, vector<64x72xbf16>
    %c0_1 = arith.constant 0 : index
    %c0_2 = arith.constant 0 : index
    %1 = vector.load %arg2[%c0_1, %c0_2] : memref<72x128xbf16, #tpu.memory_space<vmem>>, vector<72x128xbf16>
    %cst = arith.constant dense<0.000000e+00> : vector<64x128xf32>
    %2 = tpu.matmul %0, %1, %cst {dimension_numbers = #tpu.dot_dimension_numbers<[1], [0], [0], [1], [0, 0, 1, 1], [], []>} : vector<64x72xbf16>, vector<72x128xbf16>, vector<64x128xf32> -> vector<64x128xf32>
    %3 = arith.truncf %2 : vector<64x128xf32> to vector<64x128xbf16>
    %c0_3 = arith.constant 0 : index
    %c0_4 = arith.constant 0 : index
    %4 = vector.load %arg3[%c0_3, %c0_4] : memref<64x128xbf16, #tpu.memory_space<vmem>>, vector<64x128xbf16>
    tpu.vector_store %arg3[%c0_3, %c0_4], %3 {strides = array<i32>} : memref<64x128xbf16, #tpu.memory_space<vmem>>, vector<64x128xbf16>,
    %cst_5 = arith.constant dense<0.000000e+00> : vector<128xf32>
    %5 = vector.multi_reduction <add>, %2, %cst_5 [0] : vector<64x128xf32> to vector<128xf32>
    %6 = vector.shape_cast %5 : vector<128xf32> to vector<1x128xf32>
    %7 = vector.shape_cast %6 : vector<1x128xf32> to vector<1x1x128xf32>
    %c0_6 = arith.constant 0 : index
    %c0_7 = arith.constant 0 : index
    %c0_8 = arith.constant 0 : index
    %8 = vector.load %arg4[%c0_6, %c0_7, %c0_8] : memref<1x1x128xf32, #tpu.memory_space<vmem>>, vector<1x1x128xf32>
    tpu.vector_store %arg4[%c0_6, %c0_7, %c0_8], %7 {strides = array<i32>} : memref<1x1x128xf32, #tpu.memory_space<vmem>>, vector<1x1x128xf32>,
    %9 = arith.mulf %2, %2 : vector<64x128xf32>
    %cst_9 = arith.constant dense<0.000000e+00> : vector<128xf32>
    %10 = vector.multi_reduction <add>, %9, %cst_9 [0] : vector<64x128xf32> to vector<128xf32>
    %11 = vector.shape_cast %10 : vector<128xf32> to vector<1x128xf32>
    %12 = vector.shape_cast %11 : vector<1x128xf32> to vector<1x1x128xf32>
    %c0_10 = arith.constant 0 : index
    %c0_11 = arith.constant 0 : index
    %c0_12 = arith.constant 0 : index
    %13 = vector.load %arg5[%c0_10, %c0_11, %c0_12] : memref<1x1x128xf32, #tpu.memory_space<vmem>>, vector<1x1x128xf32>
    tpu.vector_store %arg5[%c0_10, %c0_11, %c0_12], %12 {strides = array<i32>} : memref<1x1x128xf32, #tpu.memory_space<vmem>>, vector<1x1x128xf32>,
    return
  }
  func.func @transform_0(%arg0: i32) -> (i32, i32) {
    %c0_i32 = arith.constant 0 : i32
    %c0_i32_0 = arith.constant 0 : i32
    return %arg0, %c0_i32 : i32, i32
  }
  func.func @transform_1(%arg0: i32) -> (i32, i32) {
    %c0_i32 = arith.constant 0 : i32
    %c0_i32_0 = arith.constant 0 : i32
    %c0_i32_1 = arith.constant 0 : i32
    return %c0_i32, %c0_i32_0 : i32, i32
  }
  func.func @transform_2(%arg0: i32) -> (i32, i32) {
    %c0_i32 = arith.constant 0 : i32
    %c0_i32_0 = arith.constant 0 : i32
    return %arg0, %c0_i32 : i32, i32
  }
  func.func @transform_3(%arg0: i32) -> (i32, i32, i32) {
    %c0_i32 = arith.constant 0 : i32
    %c0_i32_0 = arith.constant 0 : i32
    %c0_i32_1 = arith.constant 0 : i32
    return %arg0, %c0_i32, %c0_i32_0 : i32, i32, i32
  }
  func.func @transform_4(%arg0: i32) -> (i32, i32, i32) {
    %c0_i32 = arith.constant 0 : i32
    %c0_i32_0 = arith.constant 0 : i32
    %c0_i32_1 = arith.constant 0 : i32
    return %arg0, %c0_i32, %c0_i32_0 : i32, i32, i32
  }
}

module attributes {stable_mosaic.version = 11 : i64} {
  func.func @_bn_res_act_kernel(%arg0: i32, %arg1: memref<64x128xbf16, #tpu.memory_space<vmem>>, %arg2: memref<1x128xf32, #tpu.memory_space<vmem>>, %arg3: memref<1x128xf32, #tpu.memory_space<vmem>>, %arg4: memref<64x128xbf16, #tpu.memory_space<vmem>>, %arg5: memref<1x128xf32, #tpu.memory_space<vmem>>, %arg6: memref<1x128xf32, #tpu.memory_space<vmem>>, %arg7: memref<64x128xf32, #tpu.memory_space<vmem>>) attributes {dimension_semantics = [#tpu.dimension_semantics<parallel>], iteration_bounds = array<i64: 2>, scalar_prefetch = 0 : i64, scratch_operands = 0 : i64, tpu.core_type = #tpu.core_type<tc>, window_params = [{transform_indices = @transform_0, window_bounds = array<i64: 64, 128>}, {pipeline_mode = #tpu.pipeline_mode<synchronous>, transform_indices = @transform_1, window_bounds = array<i64: 1, 128>}, {pipeline_mode = #tpu.pipeline_mode<synchronous>, transform_indices = @transform_2, window_bounds = array<i64: 1, 128>}, {transform_indices = @transform_3, window_bounds = array<i64: 64, 128>}, {pipeline_mode = #tpu.pipeline_mode<synchronous>, transform_indices = @transform_4, window_bounds = array<i64: 1, 128>}, {pipeline_mode = #tpu.pipeline_mode<synchronous>, transform_indices = @transform_5, window_bounds = array<i64: 1, 128>}, {transform_indices = @transform_6, window_bounds = array<i64: 64, 128>}]} {
    %c0 = arith.constant 0 : index
    %c0_0 = arith.constant 0 : index
    %0 = vector.load %arg1[%c0, %c0_0] : memref<64x128xbf16, #tpu.memory_space<vmem>>, vector<64x128xbf16>
    %1 = arith.extf %0 : vector<64x128xbf16> to vector<64x128xf32>
    %c0_1 = arith.constant 0 : index
    %c0_2 = arith.constant 0 : index
    %2 = vector.load %arg2[%c0_1, %c0_2] : memref<1x128xf32, #tpu.memory_space<vmem>>, vector<1x128xf32>
    %3 = vector.broadcast %2 : vector<1x128xf32> to vector<64x128xf32>
    %4 = arith.mulf %1, %3 : vector<64x128xf32>
    %c0_3 = arith.constant 0 : index
    %c0_4 = arith.constant 0 : index
    %5 = vector.load %arg3[%c0_3, %c0_4] : memref<1x128xf32, #tpu.memory_space<vmem>>, vector<1x128xf32>
    %6 = vector.broadcast %5 : vector<1x128xf32> to vector<64x128xf32>
    %7 = arith.addf %4, %6 : vector<64x128xf32>
    %c0_5 = arith.constant 0 : index
    %c0_6 = arith.constant 0 : index
    %8 = vector.load %arg4[%c0_5, %c0_6] : memref<64x128xbf16, #tpu.memory_space<vmem>>, vector<64x128xbf16>
    %9 = arith.extf %8 : vector<64x128xbf16> to vector<64x128xf32>
    %c0_7 = arith.constant 0 : index
    %c0_8 = arith.constant 0 : index
    %10 = vector.load %arg5[%c0_7, %c0_8] : memref<1x128xf32, #tpu.memory_space<vmem>>, vector<1x128xf32>
    %11 = vector.broadcast %10 : vector<1x128xf32> to vector<64x128xf32>
    %12 = arith.mulf %9, %11 : vector<64x128xf32>
    %13 = arith.addf %7, %12 : vector<64x128xf32>
    %c0_9 = arith.constant 0 : index
    %c0_10 = arith.constant 0 : index
    %14 = vector.load %arg6[%c0_9, %c0_10] : memref<1x128xf32, #tpu.memory_space<vmem>>, vector<1x128xf32>
    %15 = vector.broadcast %14 : vector<1x128xf32> to vector<64x128xf32>
    %16 = arith.addf %13, %15 : vector<64x128xf32>
    %cst = arith.constant 0.000000e+00 : f32
    %17 = vector.broadcast %cst : f32 to vector<64x128xf32>
    %18 = arith.maximumf %16, %17 : vector<64x128xf32>
    %c0_11 = arith.constant 0 : index
    %c0_12 = arith.constant 0 : index
    %19 = vector.load %arg7[%c0_11, %c0_12] : memref<64x128xf32, #tpu.memory_space<vmem>>, vector<64x128xf32>
    tpu.vector_store %arg7[%c0_11, %c0_12], %18 {strides = array<i32>} : memref<64x128xf32, #tpu.memory_space<vmem>>, vector<64x128xf32>,
    return
  }
  func.func @transform_0(%arg0: i32) -> (i32, i32) {
    %c0_i32 = arith.constant 0 : i32
    %c0_i32_0 = arith.constant 0 : i32
    return %arg0, %c0_i32 : i32, i32
  }
  func.func @transform_1(%arg0: i32) -> (i32, i32) {
    %c0_i32 = arith.constant 0 : i32
    %c0_i32_0 = arith.constant 0 : i32
    %c0_i32_1 = arith.constant 0 : i32
    return %c0_i32, %c0_i32_0 : i32, i32
  }
  func.func @transform_2(%arg0: i32) -> (i32, i32) {
    %c0_i32 = arith.constant 0 : i32
    %c0_i32_0 = arith.constant 0 : i32
    %c0_i32_1 = arith.constant 0 : i32
    return %c0_i32, %c0_i32_0 : i32, i32
  }
  func.func @transform_3(%arg0: i32) -> (i32, i32) {
    %c0_i32 = arith.constant 0 : i32
    %c0_i32_0 = arith.constant 0 : i32
    return %arg0, %c0_i32 : i32, i32
  }
  func.func @transform_4(%arg0: i32) -> (i32, i32) {
    %c0_i32 = arith.constant 0 : i32
    %c0_i32_0 = arith.constant 0 : i32
    %c0_i32_1 = arith.constant 0 : i32
    return %c0_i32, %c0_i32_0 : i32, i32
  }
  func.func @transform_5(%arg0: i32) -> (i32, i32) {
    %c0_i32 = arith.constant 0 : i32
    %c0_i32_0 = arith.constant 0 : i32
    %c0_i32_1 = arith.constant 0 : i32
    return %c0_i32, %c0_i32_0 : i32, i32
  }
  func.func @transform_6(%arg0: i32) -> (i32, i32) {
    %c0_i32 = arith.constant 0 : i32
    %c0_i32_0 = arith.constant 0 : i32
    return %arg0, %c0_i32 : i32, i32
  }
}

module attributes {stable_mosaic.version = 11 : i64} {
  func.func @_conv_stats_kernel(%arg0: i32, %arg1: memref<64x4xbf16, #tpu.memory_space<vmem>>, %arg2: memref<4x128xbf16, #tpu.memory_space<vmem>>, %arg3: memref<64x128xbf16, #tpu.memory_space<vmem>>, %arg4: memref<1x1x128xf32, #tpu.memory_space<vmem>>, %arg5: memref<1x1x128xf32, #tpu.memory_space<vmem>>) attributes {dimension_semantics = [#tpu.dimension_semantics<parallel>], iteration_bounds = array<i64: 2>, scalar_prefetch = 0 : i64, scratch_operands = 0 : i64, tpu.core_type = #tpu.core_type<tc>, window_params = [{transform_indices = @transform_0, window_bounds = array<i64: 64, 4>}, {pipeline_mode = #tpu.pipeline_mode<synchronous>, transform_indices = @transform_1, window_bounds = array<i64: 4, 128>}, {transform_indices = @transform_2, window_bounds = array<i64: 64, 128>}, {transform_indices = @transform_3, window_bounds = array<i64: 1, 1, 128>}, {transform_indices = @transform_4, window_bounds = array<i64: 1, 1, 128>}]} {
    %c0 = arith.constant 0 : index
    %c0_0 = arith.constant 0 : index
    %0 = vector.load %arg1[%c0, %c0_0] : memref<64x4xbf16, #tpu.memory_space<vmem>>, vector<64x4xbf16>
    %c0_1 = arith.constant 0 : index
    %c0_2 = arith.constant 0 : index
    %1 = vector.load %arg2[%c0_1, %c0_2] : memref<4x128xbf16, #tpu.memory_space<vmem>>, vector<4x128xbf16>
    %cst = arith.constant dense<0.000000e+00> : vector<64x128xf32>
    %2 = tpu.matmul %0, %1, %cst {dimension_numbers = #tpu.dot_dimension_numbers<[1], [0], [0], [1], [0, 0, 1, 1], [], []>} : vector<64x4xbf16>, vector<4x128xbf16>, vector<64x128xf32> -> vector<64x128xf32>
    %3 = arith.truncf %2 : vector<64x128xf32> to vector<64x128xbf16>
    %c0_3 = arith.constant 0 : index
    %c0_4 = arith.constant 0 : index
    %4 = vector.load %arg3[%c0_3, %c0_4] : memref<64x128xbf16, #tpu.memory_space<vmem>>, vector<64x128xbf16>
    tpu.vector_store %arg3[%c0_3, %c0_4], %3 {strides = array<i32>} : memref<64x128xbf16, #tpu.memory_space<vmem>>, vector<64x128xbf16>,
    %cst_5 = arith.constant dense<0.000000e+00> : vector<128xf32>
    %5 = vector.multi_reduction <add>, %2, %cst_5 [0] : vector<64x128xf32> to vector<128xf32>
    %6 = vector.shape_cast %5 : vector<128xf32> to vector<1x128xf32>
    %7 = vector.shape_cast %6 : vector<1x128xf32> to vector<1x1x128xf32>
    %c0_6 = arith.constant 0 : index
    %c0_7 = arith.constant 0 : index
    %c0_8 = arith.constant 0 : index
    %8 = vector.load %arg4[%c0_6, %c0_7, %c0_8] : memref<1x1x128xf32, #tpu.memory_space<vmem>>, vector<1x1x128xf32>
    tpu.vector_store %arg4[%c0_6, %c0_7, %c0_8], %7 {strides = array<i32>} : memref<1x1x128xf32, #tpu.memory_space<vmem>>, vector<1x1x128xf32>,
    %9 = arith.mulf %2, %2 : vector<64x128xf32>
    %cst_9 = arith.constant dense<0.000000e+00> : vector<128xf32>
    %10 = vector.multi_reduction <add>, %9, %cst_9 [0] : vector<64x128xf32> to vector<128xf32>
    %11 = vector.shape_cast %10 : vector<128xf32> to vector<1x128xf32>
    %12 = vector.shape_cast %11 : vector<1x128xf32> to vector<1x1x128xf32>
    %c0_10 = arith.constant 0 : index
    %c0_11 = arith.constant 0 : index
    %c0_12 = arith.constant 0 : index
    %13 = vector.load %arg5[%c0_10, %c0_11, %c0_12] : memref<1x1x128xf32, #tpu.memory_space<vmem>>, vector<1x1x128xf32>
    tpu.vector_store %arg5[%c0_10, %c0_11, %c0_12], %12 {strides = array<i32>} : memref<1x1x128xf32, #tpu.memory_space<vmem>>, vector<1x1x128xf32>,
    return
  }
  func.func @transform_0(%arg0: i32) -> (i32, i32) {
    %c0_i32 = arith.constant 0 : i32
    %c0_i32_0 = arith.constant 0 : i32
    return %arg0, %c0_i32 : i32, i32
  }
  func.func @transform_1(%arg0: i32) -> (i32, i32) {
    %c0_i32 = arith.constant 0 : i32
    %c0_i32_0 = arith.constant 0 : i32
    %c0_i32_1 = arith.constant 0 : i32
    return %c0_i32, %c0_i32_0 : i32, i32
  }
  func.func @transform_2(%arg0: i32) -> (i32, i32) {
    %c0_i32 = arith.constant 0 : i32
    %c0_i32_0 = arith.constant 0 : i32
    return %arg0, %c0_i32 : i32, i32
  }
  func.func @transform_3(%arg0: i32) -> (i32, i32, i32) {
    %c0_i32 = arith.constant 0 : i32
    %c0_i32_0 = arith.constant 0 : i32
    %c0_i32_1 = arith.constant 0 : i32
    return %arg0, %c0_i32, %c0_i32_0 : i32, i32, i32
  }
  func.func @transform_4(%arg0: i32) -> (i32, i32, i32) {
    %c0_i32 = arith.constant 0 : i32
    %c0_i32_0 = arith.constant 0 : i32
    %c0_i32_1 = arith.constant 0 : i32
    return %arg0, %c0_i32, %c0_i32_0 : i32, i32, i32
  }
}

</mosaic_0001>

<llo_original>
// kernel: basic_block_forward.6
$region0: #{basic_block_forward.6}
  #allocation0 [shape = 'u32[]', space=smem, size = 0x4, offset = 0x4, fixed_abs, tag = 'smem constant byte address 0x4 - core index']
  #allocation1 [shape = 'u32[144,128]{1,0:T(1,128)}', space=vmem, size = 0x12000, scoped, tag = 'internal scratch']
  %s0 = inlined_call_operand.vmem [shape: bf16[128,128], index: 0, kind: input, shape index: {}]
  %s1 = inlined_call_operand.vmem [shape: f32[1,128], index: 1, kind: input, shape index: {}]
  %s2 = inlined_call_operand.vmem [shape: f32[1,128], index: 2, kind: input, shape index: {}]
  %s3 = inlined_call_operand.vmem [shape: bf16[128,128], index: 3, kind: output, shape index: {}]
  %s4 = sld [smem:[#allocation0]]
  $region45: #{basic_block_forward.6} parent=0
    _
  %s6 = ssub.s32 1, %s4
  %s7 = scalar_select 0, %s6, %s4
  loop: start=0, step=1, limit=4
  $region2: #{basic_block_forward.6} parent=0 // loop_pre_header
    _
  $region3: #{basic_block_forward.6} parent=0 // loop_header
    %s9 = sphi 0, %s13
    %p10 = scmp.ge.s32.totalorder %s9, 4
    %s19 = sphi 0, %s21
    %s22 = sphi 0, %s19
    %s23 = sphi 0, %s22
    %s39 = sphi 0, %s23
    %s43 = sphi 0, %s43
    %s45 = sphi 0, %s43
    %s46 = sphi 0, %s45
    %s60 = sphi 0, %s46
    %s64 = sphi 0, %s64
    %s66 = sphi 0, %s64
    %s67 = sphi 0, %s66
    %s81 = sphi 0, %s67
    %s87 = sphi 0, %s89
    %s90 = sphi 0, %s87
    %s91 = sphi 0, %s90
    %s107 = sphi 0, %s91
  $region4: #{basic_block_forward.6} parent=0 // loop_header_branch
    %12 = sbr.rel (%p10) target = $region8
  $region5: #{basic_block_forward.6} parent=0 // loop_body
    %s14 = ssub.s32 %s9, 1
    %s15 = ssub.s32 %s9, 2
    %s16 = sadd.s32 %s9, 1
    %s17 = ssub.s32 %s9, %s16
    %p18 = scmp.eq.s32.totalorder %s17, 0
    %s20 = sadd.s32 %s19, 1
    %s21 = scalar_select %p18, %s19, %s20
    %p24 = pneg %p18
    %p25 = scmp.eq.s32.totalorder %s9, 1
    %p26 = por %p24, %p25
    %p27 = scmp.ne.s32.totalorder %s19, %s22
    %p28 = scmp.eq.s32.totalorder %s9, 0
    %p29 = por %p27, %p28
    %p30 = scmp.ne.s32.totalorder %s19, %s22
    %p31 = scmp.eq.s32.totalorder %s14, 1
    %p32 = por %p30, %p31
    %p33 = scmp.ne.s32.totalorder %s22, %s23
    %p34 = scmp.eq.s32.totalorder %s14, 0
    %p35 = por %p33, %p34
    %p36 = scmp.ne.s32.totalorder %s22, %s23
    %p37 = scmp.eq.s32.totalorder %s15, 1
    %p38 = por %p36, %p37
    %p40 = scmp.ne.s32.totalorder %s23, %s39
    %p41 = scmp.eq.s32.totalorder %s15, 0
    %p42 = por %p40, %p41
    %s44 = sadd.s32 %s43, 1
    %p47 = scmp.eq.s32.totalorder %s9, 1
    %p48 = scmp.ne.s32.totalorder %s43, %s45
    %p49 = scmp.eq.s32.totalorder %s9, 0
    %p50 = por %p48, %p49
    %p51 = scmp.ne.s32.totalorder %s43, %s45
    %p52 = scmp.eq.s32.totalorder %s14, 1
    %p53 = por %p51, %p52
    %p54 = scmp.ne.s32.totalorder %s45, %s46
    %p55 = scmp.eq.s32.totalorder %s14, 0
    %p56 = por %p54, %p55
    %p57 = scmp.ne.s32.totalorder %s45, %s46
    %p58 = scmp.eq.s32.totalorder %s15, 1
    %p59 = por %p57, %p58
    %p61 = scmp.ne.s32.totalorder %s46, %s60
    %p62 = scmp.eq.s32.totalorder %s15, 0
    %p63 = por %p61, %p62
    %s65 = sadd.s32 %s64, 1
    %p68 = scmp.eq.s32.totalorder %s9, 1
    %p69 = scmp.ne.s32.totalorder %s64, %s66
    %p70 = scmp.eq.s32.totalorder %s9, 0
    %p71 = por %p69, %p70
    %p72 = scmp.ne.s32.totalorder %s64, %s66
    %p73 = scmp.eq.s32.totalorder %s14, 1
    %p74 = por %p72, %p73
    %p75 = scmp.ne.s32.totalorder %s66, %s67
    %p76 = scmp.eq.s32.totalorder %s14, 0
    %p77 = por %p75, %p76
    %p78 = scmp.ne.s32.totalorder %s66, %s67
    %p79 = scmp.eq.s32.totalorder %s15, 1
    %p80 = por %p78, %p79
    %p82 = scmp.ne.s32.totalorder %s67, %s81
    %p83 = scmp.eq.s32.totalorder %s15, 0
    %p84 = por %p82, %p83
    %s85 = ssub.s32 %s9, %s16
    %p86 = scmp.eq.s32.totalorder %s85, 0
    %s88 = sadd.s32 %s87, 1
    %s89 = scalar_select %p86, %s87, %s88
    %p92 = pneg %p86
    %p93 = scmp.eq.s32.totalorder %s9, 1
    %p94 = por %p92, %p93
    %p95 = scmp.ne.s32.totalorder %s87, %s90
    %p96 = scmp.eq.s32.totalorder %s9, 0
    %p97 = por %p95, %p96
    %p98 = scmp.ne.s32.totalorder %s87, %s90
    %p99 = scmp.eq.s32.totalorder %s14, 1
    %p100 = por %p98, %p99
    %p101 = scmp.ne.s32.totalorder %s90, %s91
    %p102 = scmp.eq.s32.totalorder %s14, 0
    %p103 = por %p101, %p102
    %p104 = scmp.ne.s32.totalorder %s90, %s91
    %p105 = scmp.eq.s32.totalorder %s15, 1
    %p106 = por %p104, %p105
    %p108 = scmp.ne.s32.totalorder %s91, %s107
    %p109 = scmp.eq.s32.totalorder %s15, 0
    %p110 = por %p108, %p109
    %p111 = scmp.le.s32.totalorder 1, %s9
    %p112 = scmp.lt.s32.totalorder %s9, 3
    %p113 = pnand %p111, %p112
    %p114 = pneg %p113
    // Predicated region
    $region9: #{basic_block_forward.6} parent=5 // pred_check
      _
    $region10: #{basic_block_forward.6} parent=5 // pred_check_branch
      %116 = sbr.rel (%p113) target = $region12
    $region11: #{basic_block_forward.6} parent=5 // pred_region
      %s117 = ssub.s32 %s9, 1
      // Predicated region
      $region13: #{basic_block_forward.6} parent=11 // pred_check
        %p118 = pneg %p56
      $region14: #{basic_block_forward.6} parent=11 // pred_check_branch
        %120 = sbr.rel (%p118) target = $region16
      $region15: #{basic_block_forward.6} parent=11 // pred_region
        _
      $region16: #{basic_block_forward.6} parent=11 // pred_fallthru
        _
      // Predicated region
      $region17: #{basic_block_forward.6} parent=11 // pred_check
        %p121 = pneg %p77
      $region18: #{basic_block_forward.6} parent=11 // pred_check_branch
        %123 = sbr.rel (%p121) target = $region20
      $region19: #{basic_block_forward.6} parent=11 // pred_region
        _
      $region20: #{basic_block_forward.6} parent=11 // pred_fallthru
        _
    $region12: #{basic_block_forward.6} parent=5 // pred_fallthru
      _
    %p124 = scmp.lt.s32.totalorder %s9, 2
    // Predicated region
    $region21: #{basic_block_forward.6} parent=5 // pred_check
      %p125 = pneg %p124
    $region22: #{basic_block_forward.6} parent=5 // pred_check_branch
      %127 = sbr.rel (%p125) target = $region24
    $region23: #{basic_block_forward.6} parent=5 // pred_region
      // Predicated region
      $region25: #{basic_block_forward.6} parent=23 // pred_check
        %p128 = pneg %p29
      $region26: #{basic_block_forward.6} parent=23 // pred_check_branch
        %130 = sbr.rel (%p128) target = $region28
      $region27: #{basic_block_forward.6} parent=23 // pred_region
        %s131 = smul.u32 8, %s9
        %p132 = scmp.lt.s32.totalorder %s131, 15
        %s133 = scalar_select %p132, %s131, 15
        %s134 = smul.addr %s133, 4
        %s135 = scalar_lea.vmem %s0, %s134
        %s136 = smul.u32 8, %s9
      $region28: #{basic_block_forward.6} parent=23 // pred_fallthru
        _
    $region24: #{basic_block_forward.6} parent=5 // pred_fallthru
      _
    %p137 = scmp.le.s32.totalorder 1, %s9
    %p138 = scmp.lt.s32.totalorder %s9, 3
    %p139 = pnand %p137, %p138
    %p140 = pneg %p139
    // Predicated region
    $region29: #{basic_block_forward.6} parent=5 // pred_check
      _
    $region30: #{basic_block_forward.6} parent=5 // pred_check_branch
      %142 = sbr.rel (%p139) target = $region32
    $region31: #{basic_block_forward.6} parent=5 // pred_region
      %s143 = ssub.s32 %s9, 1
      %s144 = smul.u32 8, %s14
      %p145 = scmp.lt.s32.totalorder %s144, 15
      %s146 = scalar_select %p145, %s144, 15
      %s147 = smul.addr %s146, 4
      %s148 = scalar_lea.vmem %s0, %s147
      %p149 = pneg %p35
      %p150 = pneg %p32
      %p151 = pneg %p56
      %p152 = pneg %p53
      %p153 = pneg %p77
      %p154 = pneg %p74
      %p155 = pneg %p103
      %p156 = pneg %p100
      %s157 = smul.u32 8, %s14
      %p158 = scmp.lt.s32.totalorder %s157, 15
      %s159 = scalar_select %p158, %s157, 15
      %s160 = smul.addr %s159, 4
      %s161 = scalar_lea.vmem %s3, %s160
      %s162 = smul.u32 8, %s14
      %p163 = scmp.lt.s32.totalorder %s162, 15
      %s164 = scalar_select %p163, %s162, 15
      %s165 = smul.addr %s164, 4
      %s166 = scalar_lea.vmem %s0, %s165
      %s167 = smul.u32 8, %s14
      %s168 = smul.u32 8, %s14
      %p169 = scmp.lt.s32.totalorder %s168, 15
      %s170 = scalar_select %p169, %s168, 15
      %s171 = smul.addr %s170, 4
      %s172 = scalar_lea.vmem %s3, %s171
      %s173 = smul.u32 8, %s14
      %v174 = vld [vmem:[%s166] sm:$0xf]
      %v175 = vld [vmem:[%s166 + $0x4] sm:$0xf]
      %v176 = vld [vmem:[%s166 + $0x8] sm:$0xf]
      %v177 = vld [vmem:[%s166 + $0xc] sm:$0xf]
      %v178 = vld [vmem:[%s166 + $0x10] sm:$0xf]
      %v179 = vld [vmem:[%s166 + $0x14] sm:$0xf]
      %v180 = vld [vmem:[%s166 + $0x18] sm:$0xf]
      %v181 = vld [vmem:[%s166 + $0x1c] sm:$0xf]
      %v182 = vunpack.c.l.bf16 %v174
      %v183 = vunpack.c.l.bf16 %v175
      %v184 = vunpack.c.l.bf16 %v176
      %v185 = vunpack.c.l.bf16 %v177
      %v186 = vunpack.c.l.bf16 %v178
      %v187 = vunpack.c.l.bf16 %v179
      %v188 = vunpack.c.l.bf16 %v180
      %v189 = vunpack.c.l.bf16 %v181
      %v190 = vld [vmem:[%s1] sm:$0x1]
      %v192 = vlaneseq
      %v193 = vshrl.u32 %v192, 7
      %v194 = vsub.s32 0, %v193
      %v195 = vrot.slane %v190, %v194
      %v197 = vmul.f32 %v182, %v195
      %v198 = vmul.f32 %v183, %v195
      %v199 = vmul.f32 %v184, %v195
      %v200 = vmul.f32 %v185, %v195
      %v201 = vmul.f32 %v186, %v195
      %v202 = vmul.f32 %v187, %v195
      %v203 = vmul.f32 %v188, %v195
      %v204 = vmul.f32 %v189, %v195
      %v205 = vld [vmem:[%s2] sm:$0x1]
      %v207 = vlaneseq
      %v208 = vshrl.u32 %v207, 7
      %v209 = vsub.s32 0, %v208
      %v210 = vrot.slane %v205, %v209
      %v212 = vadd.f32 %v197, %v210
      %v213 = vadd.f32 %v198, %v210
      %v214 = vadd.f32 %v199, %v210
      %v215 = vadd.f32 %v200, %v210
      %v216 = vadd.f32 %v201, %v210
      %v217 = vadd.f32 %v202, %v210
      %v218 = vadd.f32 %v203, %v210
      %v219 = vadd.f32 %v204, %v210
      %v220 = vmax.f32 %v212, 0.0
      %v221 = vmax.f32 %v213, 0.0
      %v222 = vmax.f32 %v214, 0.0
      %v223 = vmax.f32 %v215, 0.0
      %v224 = vmax.f32 %v216, 0.0
      %v225 = vmax.f32 %v217, 0.0
      %v226 = vmax.f32 %v218, 0.0
      %v227 = vmax.f32 %v219, 0.0
      %v228 = vpack.c.bf16 %v221, %v220
      %v229 = vpack.c.bf16 %v223, %v222
      %v230 = vpack.c.bf16 %v225, %v224
      %v231 = vpack.c.bf16 %v227, %v226
      %v236 = vunpack.c.l.b16 %v228
      %v237 = vunpack.c.h.b16 %v228
      %v238 = vunpack.c.l.b16 %v229
      %v239 = vunpack.c.h.b16 %v229
      %v240 = vunpack.c.l.b16 %v230
      %v241 = vunpack.c.h.b16 %v230
      %v242 = vunpack.c.l.b16 %v231
      %v243 = vunpack.c.h.b16 %v231
      %v244 = vpack.c.b16 %v236, %v236
      %v245 = vpack.c.b16 %v237, %v237
      %v246 = vpack.c.b16 %v238, %v238
      %v247 = vpack.c.b16 %v239, %v239
      %v248 = vpack.c.b16 %v240, %v240
      %v249 = vpack.c.b16 %v241, %v241
      %v250 = vpack.c.b16 %v242, %v242
      %v251 = vpack.c.b16 %v243, %v243
      %260 = vst [vmem:[%s172] sm:$0xf] %v244
      %261 = vst [vmem:[%s172 + $0x4] sm:$0xf] %v245
      %262 = vst [vmem:[%s172 + $0x8] sm:$0xf] %v246
      %263 = vst [vmem:[%s172 + $0xc] sm:$0xf] %v247
      %264 = vst [vmem:[%s172 + $0x10] sm:$0xf] %v248
      %265 = vst [vmem:[%s172 + $0x14] sm:$0xf] %v249
      %266 = vst [vmem:[%s172 + $0x18] sm:$0xf] %v250
      %267 = vst [vmem:[%s172 + $0x1c] sm:$0xf] %v251
      %s268 = smul.u32 8, %s14
      %p269 = scmp.lt.s32.totalorder %s268, 15
      %s270 = scalar_select %p269, %s268, 15
      %s271 = smul.addr %s270, 4
      %s272 = scalar_lea.vmem %s3, %s271
      // Predicated region
      $region33: #{basic_block_forward.6} parent=31 // pred_check
        %p273 = pneg %p100
      $region34: #{basic_block_forward.6} parent=31 // pred_check_branch
        %275 = sbr.rel (%p273) target = $region36
      $region35: #{basic_block_forward.6} parent=31 // pred_region
        %s276 = smul.u32 8, %s14
      $region36: #{basic_block_forward.6} parent=31 // pred_fallthru
        _
    $region32: #{basic_block_forward.6} parent=5 // pred_fallthru
      _
    %p277 = scmp.le.s32.totalorder 2, %s9
    // Predicated region
    $region37: #{basic_block_forward.6} parent=5 // pred_check
      %p278 = pneg %p277
    $region38: #{basic_block_forward.6} parent=5 // pred_check_branch
      %280 = sbr.rel (%p278) target = $region40
    $region39: #{basic_block_forward.6} parent=5 // pred_region
      %s281 = ssub.s32 %s9, 2
      // Predicated region
      $region41: #{basic_block_forward.6} parent=39 // pred_check
        %p282 = pneg %p106
      $region42: #{basic_block_forward.6} parent=39 // pred_check_branch
        %284 = sbr.rel (%p282) target = $region44
      $region43: #{basic_block_forward.6} parent=39 // pred_region
        %s285 = smul.u32 8, %s15
        %p286 = scmp.lt.s32.totalorder %s285, 15
        %s287 = scalar_select %p286, %s285, 15
        %s288 = smul.addr %s287, 4
        %s289 = scalar_lea.vmem %s3, %s288
      $region44: #{basic_block_forward.6} parent=39 // pred_fallthru
        _
    $region40: #{basic_block_forward.6} parent=5 // pred_fallthru
      _
  $region6: #{basic_block_forward.6} parent=0 // loop_footer
    %s13 = sadd.s32 1, %s9
  $region7: #{basic_block_forward.6} parent=0 // loop_footer_branch
    %8 = sbr.rel target = $region3
  $region8: #{basic_block_forward.6} parent=0 // loop_exit
    _

// kernel: basic_block_forward.5
$region0: #{basic_block_forward.5}
  #allocation0 [shape = 'u32[]', space=smem, size = 0x4, offset = 0x4, fixed_abs, tag = 'smem constant byte address 0x4 - core index']
  #allocation1 [shape = 'u32[144,128]{1,0:T(1,128)}', space=vmem, size = 0x12000, scoped, tag = 'internal scratch']
  %s0 = inlined_call_operand.vmem [shape: bf16[128,36], index: 0, kind: input, shape index: {}]
  %s1 = inlined_call_operand.vmem [shape: bf16[36,128], index: 1, kind: input, shape index: {}]
  %s2 = inlined_call_operand.vmem [shape: bf16[128,128], index: 2, kind: output, shape index: {0}]
  %s3 = inlined_call_operand.vmem [shape: f32[2,1,128], index: 3, kind: output, shape index: {1}]
  %s4 = inlined_call_operand.vmem [shape: f32[2,1,128], index: 4, kind: output, shape index: {2}]
  %5 = xla_tuple %s2, %s3, %s4
  %s6 = sld [smem:[#allocation0]]
  $region57: #{basic_block_forward.5} parent=0
    _
  %s8 = ssub.s32 1, %s6
  %s9 = scalar_select 0, %s8, %s6
  loop: start=0, step=1, limit=4
  $region2: #{basic_block_forward.5} parent=0 // loop_pre_header
    _
  $region3: #{basic_block_forward.5} parent=0 // loop_header
    %s11 = sphi 0, %s15
    %p12 = scmp.ge.s32.totalorder %s11, 4
    %s21 = sphi 0, %s23
    %s24 = sphi 0, %s21
    %s25 = sphi 0, %s24
    %s41 = sphi 0, %s25
    %s45 = sphi 0, %s45
    %s47 = sphi 0, %s45
    %s48 = sphi 0, %s47
    %s62 = sphi 0, %s48
    %s68 = sphi 0, %s70
    %s71 = sphi 0, %s68
    %s72 = sphi 0, %s71
    %s88 = sphi 0, %s72
    %s94 = sphi 0, %s96
    %s97 = sphi 0, %s94
    %s98 = sphi 0, %s97
    %s114 = sphi 0, %s98
    %s120 = sphi 0, %s122
    %s123 = sphi 0, %s120
    %s124 = sphi 0, %s123
    %s140 = sphi 0, %s124
  $region4: #{basic_block_forward.5} parent=0 // loop_header_branch
    %14 = sbr.rel (%p12) target = $region8
  $region5: #{basic_block_forward.5} parent=0 // loop_body
    %s16 = ssub.s32 %s11, 1
    %s17 = ssub.s32 %s11, 2
    %s18 = sadd.s32 %s11, 1
    %s19 = ssub.s32 %s11, %s18
    %p20 = scmp.eq.s32.totalorder %s19, 0
    %s22 = sadd.s32 %s21, 1
    %s23 = scalar_select %p20, %s21, %s22
    %p26 = pneg %p20
    %p27 = scmp.eq.s32.totalorder %s11, 1
    %p28 = por %p26, %p27
    %p29 = scmp.ne.s32.totalorder %s21, %s24
    %p30 = scmp.eq.s32.totalorder %s11, 0
    %p31 = por %p29, %p30
    %p32 = scmp.ne.s32.totalorder %s21, %s24
    %p33 = scmp.eq.s32.totalorder %s16, 1
    %p34 = por %p32, %p33
    %p35 = scmp.ne.s32.totalorder %s24, %s25
    %p36 = scmp.eq.s32.totalorder %s16, 0
    %p37 = por %p35, %p36
    %p38 = scmp.ne.s32.totalorder %s24, %s25
    %p39 = scmp.eq.s32.totalorder %s17, 1
    %p40 = por %p38, %p39
    %p42 = scmp.ne.s32.totalorder %s25, %s41
    %p43 = scmp.eq.s32.totalorder %s17, 0
    %p44 = por %p42, %p43
    %s46 = sadd.s32 %s45, 1
    %p49 = scmp.eq.s32.totalorder %s11, 1
    %p50 = scmp.ne.s32.totalorder %s45, %s47
    %p51 = scmp.eq.s32.totalorder %s11, 0
    %p52 = por %p50, %p51
    %p53 = scmp.ne.s32.totalorder %s45, %s47
    %p54 = scmp.eq.s32.totalorder %s16, 1
    %p55 = por %p53, %p54
    %p56 = scmp.ne.s32.totalorder %s47, %s48
    %p57 = scmp.eq.s32.totalorder %s16, 0
    %p58 = por %p56, %p57
    %p59 = scmp.ne.s32.totalorder %s47, %s48
    %p60 = scmp.eq.s32.totalorder %s17, 1
    %p61 = por %p59, %p60
    %p63 = scmp.ne.s32.totalorder %s48, %s62
    %p64 = scmp.eq.s32.totalorder %s17, 0
    %p65 = por %p63, %p64
    %s66 = ssub.s32 %s11, %s18
    %p67 = scmp.eq.s32.totalorder %s66, 0
    %s69 = sadd.s32 %s68, 1
    %s70 = scalar_select %p67, %s68, %s69
    %p73 = pneg %p67
    %p74 = scmp.eq.s32.totalorder %s11, 1
    %p75 = por %p73, %p74
    %p76 = scmp.ne.s32.totalorder %s68, %s71
    %p77 = scmp.eq.s32.totalorder %s11, 0
    %p78 = por %p76, %p77
    %p79 = scmp.ne.s32.totalorder %s68, %s71
    %p80 = scmp.eq.s32.totalorder %s16, 1
    %p81 = por %p79, %p80
    %p82 = scmp.ne.s32.totalorder %s71, %s72
    %p83 = scmp.eq.s32.totalorder %s16, 0
    %p84 = por %p82, %p83
    %p85 = scmp.ne.s32.totalorder %s71, %s72
    %p86 = scmp.eq.s32.totalorder %s17, 1
    %p87 = por %p85, %p86
    %p89 = scmp.ne.s32.totalorder %s72, %s88
    %p90 = scmp.eq.s32.totalorder %s17, 0
    %p91 = por %p89, %p90
    %s92 = ssub.s32 %s11, %s18
    %p93 = scmp.eq.s32.totalorder %s92, 0
    %s95 = sadd.s32 %s94, 1
    %s96 = scalar_select %p93, %s94, %s95
    %p99 = pneg %p93
    %p100 = scmp.eq.s32.totalorder %s11, 1
    %p101 = por %p99, %p100
    %p102 = scmp.ne.s32.totalorder %s94, %s97
    %p103 = scmp.eq.s32.totalorder %s11, 0
    %p104 = por %p102, %p103
    %p105 = scmp.ne.s32.totalorder %s94, %s97
    %p106 = scmp.eq.s32.totalorder %s16, 1
    %p107 = por %p105, %p106
    %p108 = scmp.ne.s32.totalorder %s97, %s98
    %p109 = scmp.eq.s32.totalorder %s16, 0
    %p110 = por %p108, %p109
    %p111 = scmp.ne.s32.totalorder %s97, %s98
    %p112 = scmp.eq.s32.totalorder %s17, 1
    %p113 = por %p111, %p112
    %p115 = scmp.ne.s32.totalorder %s98, %s114
    %p116 = scmp.eq.s32.totalorder %s17, 0
    %p117 = por %p115, %p116
    %s118 = ssub.s32 %s11, %s18
    %p119 = scmp.eq.s32.totalorder %s118, 0
    %s121 = sadd.s32 %s120, 1
    %s122 = scalar_select %p119, %s120, %s121
    %p125 = pneg %p119
    %p126 = scmp.eq.s32.totalorder %s11, 1
    %p127 = por %p125, %p126
    %p128 = scmp.ne.s32.totalorder %s120, %s123
    %p129 = scmp.eq.s32.totalorder %s11, 0
    %p130 = por %p128, %p129
    %p131 = scmp.ne.s32.totalorder %s120, %s123
    %p132 = scmp.eq.s32.totalorder %s16, 1
    %p133 = por %p131, %p132
    %p134 = scmp.ne.s32.totalorder %s123, %s124
    %p135 = scmp.eq.s32.totalorder %s16, 0
    %p136 = por %p134, %p135
    %p137 = scmp.ne.s32.totalorder %s123, %s124
    %p138 = scmp.eq.s32.totalorder %s17, 1
    %p139 = por %p137, %p138
    %p141 = scmp.ne.s32.totalorder %s124, %s140
    %p142 = scmp.eq.s32.totalorder %s17, 0
    %p143 = por %p141, %p142
    %p144 = scmp.le.s32.totalorder 1, %s11
    %p145 = scmp.lt.s32.totalorder %s11, 3
    %p146 = pnand %p144, %p145
    %p147 = pneg %p146
    // Predicated region
    $region9: #{basic_block_forward.5} parent=5 // pred_check
      _
    $region10: #{basic_block_forward.5} parent=5 // pred_check_branch
      %149 = sbr.rel (%p146) target = $region12
    $region11: #{basic_block_forward.5} parent=5 // pred_region
      %s150 = ssub.s32 %s11, 1
      // Predicated region
      $region13: #{basic_block_forward.5} parent=11 // pred_check
        %p151 = pneg %p58
      $region14: #{basic_block_forward.5} parent=11 // pred_check_branch
        %153 = sbr.rel (%p151) target = $region16
      $region15: #{basic_block_forward.5} parent=11 // pred_region
        _
      $region16: #{basic_block_forward.5} parent=11 // pred_fallthru
        _
    $region12: #{basic_block_forward.5} parent=5 // pred_fallthru
      _
    %p154 = scmp.lt.s32.totalorder %s11, 2
    // Predicated region
    $region17: #{basic_block_forward.5} parent=5 // pred_check
      %p155 = pneg %p154
    $region18: #{basic_block_forward.5} parent=5 // pred_check_branch
      %157 = sbr.rel (%p155) target = $region20
    $region19: #{basic_block_forward.5} parent=5 // pred_region
      // Predicated region
      $region21: #{basic_block_forward.5} parent=19 // pred_check
        %p158 = pneg %p31
      $region22: #{basic_block_forward.5} parent=19 // pred_check_branch
        %160 = sbr.rel (%p158) target = $region24
      $region23: #{basic_block_forward.5} parent=19 // pred_region
        %s161 = smul.u32 8, %s11
        %p162 = scmp.lt.s32.totalorder %s161, 15
        %s163 = scalar_select %p162, %s161, 15
        %s164 = smul.addr %s163, 4
        %s165 = scalar_lea.vmem %s0, %s164
        %s166 = smul.u32 8, %s11
      $region24: #{basic_block_forward.5} parent=19 // pred_fallthru
        _
    $region20: #{basic_block_forward.5} parent=5 // pred_fallthru
      _
    %p167 = scmp.le.s32.totalorder 1, %s11
    %p168 = scmp.lt.s32.totalorder %s11, 3
    %p169 = pnand %p167, %p168
    %p170 = pneg %p169
    // Predicated region
    $region25: #{basic_block_forward.5} parent=5 // pred_check
      _
    $region26: #{basic_block_forward.5} parent=5 // pred_check_branch
      %172 = sbr.rel (%p169) target = $region28
    $region27: #{basic_block_forward.5} parent=5 // pred_region
      %s173 = ssub.s32 %s11, 1
      %s174 = smul.u32 8, %s16
      %p175 = scmp.lt.s32.totalorder %s174, 15
      %s176 = scalar_select %p175, %s174, 15
      %s177 = smul.addr %s176, 4
      %s178 = scalar_lea.vmem %s0, %s177
      %p179 = pneg %p37
      %p180 = pneg %p34
      %p181 = pneg %p58
      %p182 = pneg %p55
      %p183 = pneg %p84
      %p184 = pneg %p81
      %s185 = smul.u32 8, %s16
      %p186 = scmp.lt.s32.totalorder %s185, 15
      %s187 = scalar_select %p186, %s185, 15
      %s188 = smul.addr %s187, 4
      %s189 = scalar_lea.vmem %s2, %s188
      %p190 = pneg %p110
      %p191 = pneg %p107
      %p192 = scmp.lt.s32.totalorder %s16, 1
      %s193 = scalar_select %p192, %s16, 1
      %s194 = scalar_lea.vmem %s3, %s193
      %p195 = pneg %p136
      %p196 = pneg %p133
      %p197 = scmp.lt.s32.totalorder %s16, 1
      %s198 = scalar_select %p197, %s16, 1
      %s199 = scalar_lea.vmem %s4, %s198
      %s200 = smul.u32 8, %s16
      %p201 = scmp.lt.s32.totalorder %s200, 15
      %s202 = scalar_select %p201, %s200, 15
      %s203 = smul.addr %s202, 4
      %s204 = scalar_lea.vmem %s0, %s203
      %s205 = smul.u32 8, %s16
      %s206 = smul.u32 8, %s16
      %p207 = scmp.lt.s32.totalorder %s206, 15
      %s208 = scalar_select %p207, %s206, 15
      %s209 = smul.addr %s208, 4
      %s210 = scalar_lea.vmem %s2, %s209
      %s211 = smul.u32 8, %s16
      %p212 = scmp.lt.s32.totalorder %s16, 1
      %s213 = scalar_select %p212, %s16, 1
      %s214 = scalar_lea.vmem %s3, %s213
      %p215 = scmp.lt.s32.totalorder %s16, 1
      %s216 = scalar_select %p215, %s16, 1
      %s217 = scalar_lea.vmem %s4, %s216
      %v219 = vld [vmem:[%s204] sm:$0xf]
      %v220 = vld [vmem:[%s204 + $0x4] sm:$0xf]
      %v221 = vld [vmem:[%s204 + $0x8] sm:$0xf]
      %v222 = vld [vmem:[%s204 + $0xc] sm:$0xf]
      %v223 = vld [vmem:[%s204 + $0x10] sm:$0xf]
      %v224 = vld [vmem:[%s204 + $0x14] sm:$0xf]
      %v225 = vld [vmem:[%s204 + $0x18] sm:$0xf]
      %v226 = vld [vmem:[%s204 + $0x1c] sm:$0xf]
      %v227 = vld [vmem:[%s1] sm:$0xf]
      %v228 = vld [vmem:[%s1 + $0x4] sm:$0xf]
      %v229 = vld [vmem:[%s1 + $0x8] sm:$0xf]
      %v230 = vld [vmem:[%s1 + $0xc] sm:$0xf]
      %v231 = vld [vmem:[%s1 + $0x10] sm:$0x3]
      %v240 = vunpack.c.l.b16 %v219
      %v241 = vunpack.c.l.b16 %v220
      %v242 = vunpack.c.l.b16 %v221
      %v243 = vunpack.c.l.b16 %v222
      %v244 = vunpack.c.l.b16 %v223
      %v245 = vunpack.c.l.b16 %v224
      %v246 = vunpack.c.l.b16 %v225
      %v247 = vunpack.c.l.b16 %v226
      %v248 = vpack.c.b16 %v241, %v240
      %v249 = vpack.c.b16 %v243, %v242
      %v250 = vpack.c.b16 %v245, %v244
      %v251 = vpack.c.b16 %v247, %v246
      %v257 = vunpack.c.l.b16 %v227
      %v258 = vunpack.c.l.b16 %v228
      %v259 = vunpack.c.l.b16 %v229
      %v260 = vunpack.c.l.b16 %v230
      %v261 = vunpack.c.l.b16 %v231
      %v262 = vpack.c.b16 %v258, %v257
      %v263 = vpack.c.b16 %v260, %v259
      %v264 = vpack.c.b16 %v261, %v261
      %vm267 = vcmask 293888
      %v269 = vsel %vm267, %v248, 0
      %v272 = vsel %vm267, %v249, 0
      %v275 = vsel %vm267, %v250, 0
      %v278 = vsel %vm267, %v251, 0
      %vm280 = vcmask 1041408
      %v282 = vsel %vm280, %v264, 0
      %284 = vmatprep.subr.bf16.mxu0 0
      %285 = vmatpush1.bf16.msra.mxu0 %v262
      %286 = vmatprep.subr.bf16.mxu0 0
      %287 = vmatpush1.bf16.msra.mxu0 %v263
      %288 = vmatprep.subr.bf16.mxu0 0
      %289 = vmatpush1.bf16.msra.mxu0 %v282
      %290 = vmatprep.subr.bf16.mxu0 0
      %291 = vmatpush1.bf16.msra.mxu0 0
      %292 = vmatprep.subr.bf16.mxu0 0
      %293 = vmatpush1.bf16.msra.mxu0 0
      %294 = vmatprep.subr.bf16.mxu0 0
      %295 = vmatpush1.bf16.msra.mxu0 0
      %296 = vmatprep.subr.bf16.mxu0 0
      %297 = vmatpush1.bf16.msra.mxu0 0
      %298 = vmatprep.subr.bf16.mxu0 0
      %299 = vmatpush1.bf16.msra.mxu0 0
      %300 = vmatprep.subr.bf16.mxu0 0
      %301 = vmatpush1.bf16.msra.mxu0 0
      %302 = vmatprep.subr.bf16.mxu0 0
      %303 = vmatpush1.bf16.msra.mxu0 0
      %304 = vmatprep.subr.bf16.mxu0 0
      %305 = vmatpush1.bf16.msra.mxu0 0
      %306 = vmatprep.subr.bf16.mxu0 0
      %307 = vmatpush1.bf16.msra.mxu0 0
      %308 = vmatprep.subr.bf16.mxu0 0
      %309 = vmatpush1.bf16.msra.mxu0 0
      %310 = vmatprep.subr.bf16.mxu0 0
      %311 = vmatpush1.bf16.msra.mxu0 0
      %312 = vmatprep.subr.bf16.mxu0 0
      %313 = vmatpush1.bf16.msra.mxu0 0
      %314 = vmatprep.subr.bf16.mxu0 0
      %315 = vmatpush1.bf16.msra.mxu0 0
      %316 = vmatprep.mubr.bf16.mxu0 0
      %317 = vmatmul.mubr.bf16.gmra.mrb[0].mxu0 %v269
      %v318 = vpop.f32.mrb[0].mxu0
      %v319 = vadd.f32 0.0, %v318
      %v320 = vpop.f32.mrb[0].mxu0
      %v321 = vpop.f32.mrb[0].mxu0
      %v322 = vadd.f32 0.0, %v321
      %v323 = vpop.f32.mrb[0].mxu0
      %324 = vmatprep.mubr.bf16.mxu0 0
      %325 = vmatmul.mubr.bf16.gmra.mrb[0].mxu0 %v272
      %v326 = vpop.f32.mrb[0].mxu0
      %v327 = vadd.f32 0.0, %v326
      %v328 = vpop.f32.mrb[0].mxu0
      %v329 = vpop.f32.mrb[0].mxu0
      %v330 = vadd.f32 0.0, %v329
      %v331 = vpop.f32.mrb[0].mxu0
      %332 = vmatprep.mubr.bf16.mxu0 0
      %333 = vmatmul.mubr.bf16.gmra.mrb[0].mxu0 %v275
      %v334 = vpop.f32.mrb[0].mxu0
      %v335 = vadd.f32 0.0, %v334
      %v336 = vpop.f32.mrb[0].mxu0
      %v337 = vpop.f32.mrb[0].mxu0
      %v338 = vadd.f32 0.0, %v337
      %v339 = vpop.f32.mrb[0].mxu0
      %340 = vmatprep.mubr.bf16.mxu0 0
      %341 = vmatmul.mubr.bf16.gmra.mrb[0].mxu0 %v278
      %v342 = vpop.f32.mrb[0].mxu0
      %v343 = vadd.f32 0.0, %v342
      %v344 = vpop.f32.mrb[0].mxu0
      %v345 = vpop.f32.mrb[0].mxu0
      %v346 = vadd.f32 0.0, %v345
      %v347 = vpop.f32.mrb[0].mxu0
      %348 = vdwg.mxu0
      %v349 = vpack.c.bf16 %v322, %v319
      %v350 = vpack.c.bf16 %v330, %v327
      %v351 = vpack.c.bf16 %v338, %v335
      %v352 = vpack.c.bf16 %v346, %v343
      %v357 = vunpack.c.l.b16 %v349
      %v358 = vunpack.c.h.b16 %v349
      %v359 = vunpack.c.l.b16 %v350
      %v360 = vunpack.c.h.b16 %v350
      %v361 = vunpack.c.l.b16 %v351
      %v362 = vunpack.c.h.b16 %v351
      %v363 = vunpack.c.l.b16 %v352
      %v364 = vunpack.c.h.b16 %v352
      %v365 = vpack.c.b16 %v357, %v357
      %v366 = vpack.c.b16 %v358, %v358
      %v367 = vpack.c.b16 %v359, %v359
      %v368 = vpack.c.b16 %v360, %v360
      %v369 = vpack.c.b16 %v361, %v361
      %v370 = vpack.c.b16 %v362, %v362
      %v371 = vpack.c.b16 %v363, %v363
      %v372 = vpack.c.b16 %v364, %v364
      %381 = vst [vmem:[%s210] sm:$0xf] %v365
      %382 = vst [vmem:[%s210 + $0x4] sm:$0xf] %v366
      %383 = vst [vmem:[%s210 + $0x8] sm:$0xf] %v367
      %384 = vst [vmem:[%s210 + $0xc] sm:$0xf] %v368
      %385 = vst [vmem:[%s210 + $0x10] sm:$0xf] %v369
      %386 = vst [vmem:[%s210 + $0x14] sm:$0xf] %v370
      %387 = vst [vmem:[%s210 + $0x18] sm:$0xf] %v371
      %388 = vst [vmem:[%s210 + $0x1c] sm:$0xf] %v372
      %v389 = vadd.f32 %v319, %v322
      %v390 = vadd.f32 %v389, %v327
      %v391 = vadd.f32 %v390, %v330
      %v392 = vadd.f32 %v391, %v335
      %v393 = vadd.f32 %v392, %v338
      %v394 = vadd.f32 %v393, %v343
      %v395 = vadd.f32 %v394, %v346
      %v396 = vrot.slane %v395, 4
      %v397 = vadd.f32 %v395, %v396
      %v398 = vrot.slane %v397, 2
      %v399 = vadd.f32 %v397, %v398
      %v400 = vrot.slane %v399, 1
      %v401 = vadd.f32 %v399, %v400
      %402 = vst [vmem:[%s214] sm:$0x1] %v401
      %v403 = vmul.f32 %v319, %v319
      %v404 = vmul.f32 %v322, %v322
      %v405 = vmul.f32 %v327, %v327
      %v406 = vmul.f32 %v330, %v330
      %v407 = vmul.f32 %v335, %v335
      %v408 = vmul.f32 %v338, %v338
      %v409 = vmul.f32 %v343, %v343
      %v410 = vmul.f32 %v346, %v346
      %v411 = vadd.f32 %v403, %v404
      %v412 = vadd.f32 %v411, %v405
      %v413 = vadd.f32 %v412, %v406
      %v414 = vadd.f32 %v413, %v407
      %v415 = vadd.f32 %v414, %v408
      %v416 = vadd.f32 %v415, %v409
      %v417 = vadd.f32 %v416, %v410
      %v418 = vrot.slane %v417, 4
      %v419 = vadd.f32 %v417, %v418
      %v420 = vrot.slane %v419, 2
      %v421 = vadd.f32 %v419, %v420
      %v422 = vrot.slane %v421, 1
      %v423 = vadd.f32 %v421, %v422
      %424 = vst [vmem:[%s217] sm:$0x1] %v423
      %s425 = smul.u32 8, %s16
      %p426 = scmp.lt.s32.totalorder %s425, 15
      %s427 = scalar_select %p426, %s425, 15
      %s428 = smul.addr %s427, 4
      %s429 = scalar_lea.vmem %s2, %s428
      %p430 = scmp.lt.s32.totalorder %s16, 1
      %s431 = scalar_select %p430, %s16, 1
      %s432 = scalar_lea.vmem %s3, %s431
      %p433 = scmp.lt.s32.totalorder %s16, 1
      %s434 = scalar_select %p433, %s16, 1
      %s435 = scalar_lea.vmem %s4, %s434
      // Predicated region
      $region29: #{basic_block_forward.5} parent=27 // pred_check
        %p436 = pneg %p81
      $region30: #{basic_block_forward.5} parent=27 // pred_check_branch
        %438 = sbr.rel (%p436) target = $region32
      $region31: #{basic_block_forward.5} parent=27 // pred_region
        %s439 = smul.u32 8, %s16
      $region32: #{basic_block_forward.5} parent=27 // pred_fallthru
        _
      // Predicated region
      $region33: #{basic_block_forward.5} parent=27 // pred_check
        %p440 = pneg %p107
      $region34: #{basic_block_forward.5} parent=27 // pred_check_branch
        %442 = sbr.rel (%p440) target = $region36
      $region35: #{basic_block_forward.5} parent=27 // pred_region
        _
      $region36: #{basic_block_forward.5} parent=27 // pred_fallthru
        _
      // Predicated region
      $region37: #{basic_block_forward.5} parent=27 // pred_check
        %p443 = pneg %p133
      $region38: #{basic_block_forward.5} parent=27 // pred_check_branch
        %445 = sbr.rel (%p443) target = $region40
      $region39: #{basic_block_forward.5} parent=27 // pred_region
        _
      $region40: #{basic_block_forward.5} parent=27 // pred_fallthru
        _
    $region28: #{basic_block_forward.5} parent=5 // pred_fallthru
      _
    %p446 = scmp.le.s32.totalorder 2, %s11
    // Predicated region
    $region41: #{basic_block_forward.5} parent=5 // pred_check
      %p447 = pneg %p446
    $region42: #{basic_block_forward.5} parent=5 // pred_check_branch
      %449 = sbr.rel (%p447) target = $region44
    $region43: #{basic_block_forward.5} parent=5 // pred_region
      %s450 = ssub.s32 %s11, 2
      // Predicated region
      $region45: #{basic_block_forward.5} parent=43 // pred_check
        %p451 = pneg %p87
      $region46: #{basic_block_forward.5} parent=43 // pred_check_branch
        %453 = sbr.rel (%p451) target = $region48
      $region47: #{basic_block_forward.5} parent=43 // pred_region
        %s454 = smul.u32 8, %s17
        %p455 = scmp.lt.s32.totalorder %s454, 15
        %s456 = scalar_select %p455, %s454, 15
        %s457 = smul.addr %s456, 4
        %s458 = scalar_lea.vmem %s2, %s457
      $region48: #{basic_block_forward.5} parent=43 // pred_fallthru
        _
      // Predicated region
      $region49: #{basic_block_forward.5} parent=43 // pred_check
        %p459 = pneg %p113
      $region50: #{basic_block_forward.5} parent=43 // pred_check_branch
        %461 = sbr.rel (%p459) target = $region52
      $region51: #{basic_block_forward.5} parent=43 // pred_region
        %p462 = scmp.lt.s32.totalorder %s17, 1
        %s463 = scalar_select %p462, %s17, 1
        %s464 = scalar_lea.vmem %s3, %s463
      $region52: #{basic_block_forward.5} parent=43 // pred_fallthru
        _
      // Predicated region
      $region53: #{basic_block_forward.5} parent=43 // pred_check
        %p465 = pneg %p139
      $region54: #{basic_block_forward.5} parent=43 // pred_check_branch
        %467 = sbr.rel (%p465) target = $region56
      $region55: #{basic_block_forward.5} parent=43 // pred_region
        %p468 = scmp.lt.s32.totalorder %s17, 1
        %s469 = scalar_select %p468, %s17, 1
        %s470 = scalar_lea.vmem %s4, %s469
      $region56: #{basic_block_forward.5} parent=43 // pred_fallthru
        _
    $region44: #{basic_block_forward.5} parent=5 // pred_fallthru
      _
  $region6: #{basic_block_forward.5} parent=0 // loop_footer
    %s15 = sadd.s32 1, %s11
  $region7: #{basic_block_forward.5} parent=0 // loop_footer_branch
    %10 = sbr.rel target = $region3
  $region8: #{basic_block_forward.5} parent=0 // loop_exit
    _

// kernel: basic_block_forward.9
$region0: #{basic_block_forward.9}
  #allocation0 [shape = 'u32[]', space=smem, size = 0x4, offset = 0x4, fixed_abs, tag = 'smem constant byte address 0x4 - core index']
  #allocation1 [shape = 'u32[144,128]{1,0:T(1,128)}', space=vmem, size = 0x12000, scoped, tag = 'internal scratch']
  %s0 = inlined_call_operand.vmem [shape: bf16[128,128], index: 0, kind: input, shape index: {}]
  %s1 = inlined_call_operand.vmem [shape: f32[1,128], index: 1, kind: input, shape index: {}]
  %s2 = inlined_call_operand.vmem [shape: f32[1,128], index: 2, kind: input, shape index: {}]
  %s3 = inlined_call_operand.vmem [shape: bf16[128,128], index: 3, kind: input, shape index: {}]
  %s4 = inlined_call_operand.vmem [shape: f32[1,128], index: 4, kind: input, shape index: {}]
  %s5 = inlined_call_operand.vmem [shape: f32[1,128], index: 5, kind: input, shape index: {}]
  %s6 = inlined_call_operand.vmem [shape: f32[128,128], index: 6, kind: output, shape index: {}]
  %s7 = sld [smem:[#allocation0]]
  $region57: #{basic_block_forward.9} parent=0
    _
  %s9 = ssub.s32 1, %s7
  %s10 = scalar_select 0, %s9, %s7
  loop: start=0, step=1, limit=4
  $region2: #{basic_block_forward.9} parent=0 // loop_pre_header
    _
  $region3: #{basic_block_forward.9} parent=0 // loop_header
    %s12 = sphi 0, %s16
    %p13 = scmp.ge.s32.totalorder %s12, 4
    %s22 = sphi 0, %s24
    %s25 = sphi 0, %s22
    %s26 = sphi 0, %s25
    %s42 = sphi 0, %s26
    %s46 = sphi 0, %s46
    %s48 = sphi 0, %s46
    %s49 = sphi 0, %s48
    %s63 = sphi 0, %s49
    %s67 = sphi 0, %s67
    %s69 = sphi 0, %s67
    %s70 = sphi 0, %s69
    %s84 = sphi 0, %s70
    %s90 = sphi 0, %s92
    %s93 = sphi 0, %s90
    %s94 = sphi 0, %s93
    %s110 = sphi 0, %s94
    %s114 = sphi 0, %s114
    %s116 = sphi 0, %s114
    %s117 = sphi 0, %s116
    %s131 = sphi 0, %s117
    %s135 = sphi 0, %s135
    %s137 = sphi 0, %s135
    %s138 = sphi 0, %s137
    %s152 = sphi 0, %s138
    %s158 = sphi 0, %s160
    %s161 = sphi 0, %s158
    %s162 = sphi 0, %s161
    %s178 = sphi 0, %s162
  $region4: #{basic_block_forward.9} parent=0 // loop_header_branch
    %15 = sbr.rel (%p13) target = $region8
  $region5: #{basic_block_forward.9} parent=0 // loop_body
    %s17 = ssub.s32 %s12, 1
    %s18 = ssub.s32 %s12, 2
    %s19 = sadd.s32 %s12, 1
    %s20 = ssub.s32 %s12, %s19
    %p21 = scmp.eq.s32.totalorder %s20, 0
    %s23 = sadd.s32 %s22, 1
    %s24 = scalar_select %p21, %s22, %s23
    %p27 = pneg %p21
    %p28 = scmp.eq.s32.totalorder %s12, 1
    %p29 = por %p27, %p28
    %p30 = scmp.ne.s32.totalorder %s22, %s25
    %p31 = scmp.eq.s32.totalorder %s12, 0
    %p32 = por %p30, %p31
    %p33 = scmp.ne.s32.totalorder %s22, %s25
    %p34 = scmp.eq.s32.totalorder %s17, 1
    %p35 = por %p33, %p34
    %p36 = scmp.ne.s32.totalorder %s25, %s26
    %p37 = scmp.eq.s32.totalorder %s17, 0
    %p38 = por %p36, %p37
    %p39 = scmp.ne.s32.totalorder %s25, %s26
    %p40 = scmp.eq.s32.totalorder %s18, 1
    %p41 = por %p39, %p40
    %p43 = scmp.ne.s32.totalorder %s26, %s42
    %p44 = scmp.eq.s32.totalorder %s18, 0
    %p45 = por %p43, %p44
    %s47 = sadd.s32 %s46, 1
    %p50 = scmp.eq.s32.totalorder %s12, 1
    %p51 = scmp.ne.s32.totalorder %s46, %s48
    %p52 = scmp.eq.s32.totalorder %s12, 0
    %p53 = por %p51, %p52
    %p54 = scmp.ne.s32.totalorder %s46, %s48
    %p55 = scmp.eq.s32.totalorder %s17, 1
    %p56 = por %p54, %p55
    %p57 = scmp.ne.s32.totalorder %s48, %s49
    %p58 = scmp.eq.s32.totalorder %s17, 0
    %p59 = por %p57, %p58
    %p60 = scmp.ne.s32.totalorder %s48, %s49
    %p61 = scmp.eq.s32.totalorder %s18, 1
    %p62 = por %p60, %p61
    %p64 = scmp.ne.s32.totalorder %s49, %s63
    %p65 = scmp.eq.s32.totalorder %s18, 0
    %p66 = por %p64, %p65
    %s68 = sadd.s32 %s67, 1
    %p71 = scmp.eq.s32.totalorder %s12, 1
    %p72 = scmp.ne.s32.totalorder %s67, %s69
    %p73 = scmp.eq.s32.totalorder %s12, 0
    %p74 = por %p72, %p73
    %p75 = scmp.ne.s32.totalorder %s67, %s69
    %p76 = scmp.eq.s32.totalorder %s17, 1
    %p77 = por %p75, %p76
    %p78 = scmp.ne.s32.totalorder %s69, %s70
    %p79 = scmp.eq.s32.totalorder %s17, 0
    %p80 = por %p78, %p79
    %p81 = scmp.ne.s32.totalorder %s69, %s70
    %p82 = scmp.eq.s32.totalorder %s18, 1
    %p83 = por %p81, %p82
    %p85 = scmp.ne.s32.totalorder %s70, %s84
    %p86 = scmp.eq.s32.totalorder %s18, 0
    %p87 = por %p85, %p86
    %s88 = ssub.s32 %s12, %s19
    %p89 = scmp.eq.s32.totalorder %s88, 0
    %s91 = sadd.s32 %s90, 1
    %s92 = scalar_select %p89, %s90, %s91
    %p95 = pneg %p89
    %p96 = scmp.eq.s32.totalorder %s12, 1
    %p97 = por %p95, %p96
    %p98 = scmp.ne.s32.totalorder %s90, %s93
    %p99 = scmp.eq.s32.totalorder %s12, 0
    %p100 = por %p98, %p99
    %p101 = scmp.ne.s32.totalorder %s90, %s93
    %p102 = scmp.eq.s32.totalorder %s17, 1
    %p103 = por %p101, %p102
    %p104 = scmp.ne.s32.totalorder %s93, %s94
    %p105 = scmp.eq.s32.totalorder %s17, 0
    %p106 = por %p104, %p105
    %p107 = scmp.ne.s32.totalorder %s93, %s94
    %p108 = scmp.eq.s32.totalorder %s18, 1
    %p109 = por %p107, %p108
    %p111 = scmp.ne.s32.totalorder %s94, %s110
    %p112 = scmp.eq.s32.totalorder %s18, 0
    %p113 = por %p111, %p112
    %s115 = sadd.s32 %s114, 1
    %p118 = scmp.eq.s32.totalorder %s12, 1
    %p119 = scmp.ne.s32.totalorder %s114, %s116
    %p120 = scmp.eq.s32.totalorder %s12, 0
    %p121 = por %p119, %p120
    %p122 = scmp.ne.s32.totalorder %s114, %s116
    %p123 = scmp.eq.s32.totalorder %s17, 1
    %p124 = por %p122, %p123
    %p125 = scmp.ne.s32.totalorder %s116, %s117
    %p126 = scmp.eq.s32.totalorder %s17, 0
    %p127 = por %p125, %p126
    %p128 = scmp.ne.s32.totalorder %s116, %s117
    %p129 = scmp.eq.s32.totalorder %s18, 1
    %p130 = por %p128, %p129
    %p132 = scmp.ne.s32.totalorder %s117, %s131
    %p133 = scmp.eq.s32.totalorder %s18, 0
    %p134 = por %p132, %p133
    %s136 = sadd.s32 %s135, 1
    %p139 = scmp.eq.s32.totalorder %s12, 1
    %p140 = scmp.ne.s32.totalorder %s135, %s137
    %p141 = scmp.eq.s32.totalorder %s12, 0
    %p142 = por %p140, %p141
    %p143 = scmp.ne.s32.totalorder %s135, %s137
    %p144 = scmp.eq.s32.totalorder %s17, 1
    %p145 = por %p143, %p144
    %p146 = scmp.ne.s32.totalorder %s137, %s138
    %p147 = scmp.eq.s32.totalorder %s17, 0
    %p148 = por %p146, %p147
    %p149 = scmp.ne.s32.totalorder %s137, %s138
    %p150 = scmp.eq.s32.totalorder %s18, 1
    %p151 = por %p149, %p150
    %p153 = scmp.ne.s32.totalorder %s138, %s152
    %p154 = scmp.eq.s32.totalorder %s18, 0
    %p155 = por %p153, %p154
    %s156 = ssub.s32 %s12, %s19
    %p157 = scmp.eq.s32.totalorder %s156, 0
    %s159 = sadd.s32 %s158, 1
    %s160 = scalar_select %p157, %s158, %s159
    %p163 = pneg %p157
    %p164 = scmp.eq.s32.totalorder %s12, 1
    %p165 = por %p163, %p164
    %p166 = scmp.ne.s32.totalorder %s158, %s161
    %p167 = scmp.eq.s32.totalorder %s12, 0
    %p168 = por %p166, %p167
    %p169 = scmp.ne.s32.totalorder %s158, %s161
    %p170 = scmp.eq.s32.totalorder %s17, 1
    %p171 = por %p169, %p170
    %p172 = scmp.ne.s32.totalorder %s161, %s162
    %p173 = scmp.eq.s32.totalorder %s17, 0
    %p174 = por %p172, %p173
    %p175 = scmp.ne.s32.totalorder %s161, %s162
    %p176 = scmp.eq.s32.totalorder %s18, 1
    %p177 = por %p175, %p176
    %p179 = scmp.ne.s32.totalorder %s162, %s178
    %p180 = scmp.eq.s32.totalorder %s18, 0
    %p181 = por %p179, %p180
    %p182 = scmp.le.s32.totalorder 1, %s12
    %p183 = scmp.lt.s32.totalorder %s12, 3
    %p184 = pnand %p182, %p183
    %p185 = pneg %p184
    // Predicated region
    $region9: #{basic_block_forward.9} parent=5 // pred_check
      _
    $region10: #{basic_block_forward.9} parent=5 // pred_check_branch
      %187 = sbr.rel (%p184) target = $region12
    $region11: #{basic_block_forward.9} parent=5 // pred_region
      %s188 = ssub.s32 %s12, 1
      // Predicated region
      $region13: #{basic_block_forward.9} parent=11 // pred_check
        %p189 = pneg %p59
      $region14: #{basic_block_forward.9} parent=11 // pred_check_branch
        %191 = sbr.rel (%p189) target = $region16
      $region15: #{basic_block_forward.9} parent=11 // pred_region
        _
      $region16: #{basic_block_forward.9} parent=11 // pred_fallthru
        _
      // Predicated region
      $region17: #{basic_block_forward.9} parent=11 // pred_check
        %p192 = pneg %p80
      $region18: #{basic_block_forward.9} parent=11 // pred_check_branch
        %194 = sbr.rel (%p192) target = $region20
      $region19: #{basic_block_forward.9} parent=11 // pred_region
        _
      $region20: #{basic_block_forward.9} parent=11 // pred_fallthru
        _
      // Predicated region
      $region21: #{basic_block_forward.9} parent=11 // pred_check
        %p195 = pneg %p127
      $region22: #{basic_block_forward.9} parent=11 // pred_check_branch
        %197 = sbr.rel (%p195) target = $region24
      $region23: #{basic_block_forward.9} parent=11 // pred_region
        _
      $region24: #{basic_block_forward.9} parent=11 // pred_fallthru
        _
      // Predicated region
      $region25: #{basic_block_forward.9} parent=11 // pred_check
        %p198 = pneg %p148
      $region26: #{basic_block_forward.9} parent=11 // pred_check_branch
        %200 = sbr.rel (%p198) target = $region28
      $region27: #{basic_block_forward.9} parent=11 // pred_region
        _
      $region28: #{basic_block_forward.9} parent=11 // pred_fallthru
        _
    $region12: #{basic_block_forward.9} parent=5 // pred_fallthru
      _
    %p201 = scmp.lt.s32.totalorder %s12, 2
    // Predicated region
    $region29: #{basic_block_forward.9} parent=5 // pred_check
      %p202 = pneg %p201
    $region30: #{basic_block_forward.9} parent=5 // pred_check_branch
      %204 = sbr.rel (%p202) target = $region32
    $region31: #{basic_block_forward.9} parent=5 // pred_region
      // Predicated region
      $region33: #{basic_block_forward.9} parent=31 // pred_check
        %p205 = pneg %p32
      $region34: #{basic_block_forward.9} parent=31 // pred_check_branch
        %207 = sbr.rel (%p205) target = $region36
      $region35: #{basic_block_forward.9} parent=31 // pred_region
        %s208 = smul.u32 8, %s12
        %p209 = scmp.lt.s32.totalorder %s208, 15
        %s210 = scalar_select %p209, %s208, 15
        %s211 = smul.addr %s210, 4
        %s212 = scalar_lea.vmem %s0, %s211
        %s213 = smul.u32 8, %s12
      $region36: #{basic_block_forward.9} parent=31 // pred_fallthru
        _
      // Predicated region
      $region37: #{basic_block_forward.9} parent=31 // pred_check
        %p214 = pneg %p100
      $region38: #{basic_block_forward.9} parent=31 // pred_check_branch
        %216 = sbr.rel (%p214) target = $region40
      $region39: #{basic_block_forward.9} parent=31 // pred_region
        %s217 = smul.u32 8, %s12
        %p218 = scmp.lt.s32.totalorder %s217, 15
        %s219 = scalar_select %p218, %s217, 15
        %s220 = smul.addr %s219, 4
        %s221 = scalar_lea.vmem %s3, %s220
        %s222 = smul.u32 8, %s12
      $region40: #{basic_block_forward.9} parent=31 // pred_fallthru
        _
    $region32: #{basic_block_forward.9} parent=5 // pred_fallthru
      _
    %p223 = scmp.le.s32.totalorder 1, %s12
    %p224 = scmp.lt.s32.totalorder %s12, 3
    %p225 = pnand %p223, %p224
    %p226 = pneg %p225
    // Predicated region
    $region41: #{basic_block_forward.9} parent=5 // pred_check
      _
    $region42: #{basic_block_forward.9} parent=5 // pred_check_branch
      %228 = sbr.rel (%p225) target = $region44
    $region43: #{basic_block_forward.9} parent=5 // pred_region
      %s229 = ssub.s32 %s12, 1
      %s230 = smul.u32 8, %s17
      %p231 = scmp.lt.s32.totalorder %s230, 15
      %s232 = scalar_select %p231, %s230, 15
      %s233 = smul.addr %s232, 4
      %s234 = scalar_lea.vmem %s0, %s233
      %p235 = pneg %p38
      %p236 = pneg %p35
      %p237 = pneg %p59
      %p238 = pneg %p56
      %p239 = pneg %p80
      %p240 = pneg %p77
      %s241 = smul.u32 8, %s17
      %p242 = scmp.lt.s32.totalorder %s241, 15
      %s243 = scalar_select %p242, %s241, 15
      %s244 = smul.addr %s243, 4
      %s245 = scalar_lea.vmem %s3, %s244
      %p246 = pneg %p106
      %p247 = pneg %p103
      %p248 = pneg %p127
      %p249 = pneg %p124
      %p250 = pneg %p148
      %p251 = pneg %p145
      %p252 = pneg %p174
      %p253 = pneg %p171
      %s254 = smul.u32 8, %s17
      %p255 = scmp.lt.s32.totalorder %s254, 15
      %s256 = scalar_select %p255, %s254, 15
      %s257 = smul.addr %s256, 8
      %s258 = scalar_lea.vmem %s6, %s257
      %s259 = smul.u32 8, %s17
      %p260 = scmp.lt.s32.totalorder %s259, 15
      %s261 = scalar_select %p260, %s259, 15
      %s262 = smul.addr %s261, 4
      %s263 = scalar_lea.vmem %s0, %s262
      %s264 = smul.u32 8, %s17
      %s265 = smul.u32 8, %s17
      %p266 = scmp.lt.s32.totalorder %s265, 15
      %s267 = scalar_select %p266, %s265, 15
      %s268 = smul.addr %s267, 4
      %s269 = scalar_lea.vmem %s3, %s268
      %s270 = smul.u32 8, %s17
      %s271 = smul.u32 8, %s17
      %p272 = scmp.lt.s32.totalorder %s271, 15
      %s273 = scalar_select %p272, %s271, 15
      %s274 = smul.addr %s273, 8
      %s275 = scalar_lea.vmem %s6, %s274
      %s276 = smul.u32 8, %s17
      %v277 = vld [vmem:[%s263] sm:$0xf]
      %v278 = vld [vmem:[%s263 + $0x4] sm:$0xf]
      %v279 = vld [vmem:[%s263 + $0x8] sm:$0xf]
      %v280 = vld [vmem:[%s263 + $0xc] sm:$0xf]
      %v281 = vld [vmem:[%s263 + $0x10] sm:$0xf]
      %v282 = vld [vmem:[%s263 + $0x14] sm:$0xf]
      %v283 = vld [vmem:[%s263 + $0x18] sm:$0xf]
      %v284 = vld [vmem:[%s263 + $0x1c] sm:$0xf]
      %v285 = vunpack.c.l.bf16 %v277
      %v286 = vunpack.c.l.bf16 %v278
      %v287 = vunpack.c.l.bf16 %v279
      %v288 = vunpack.c.l.bf16 %v280
      %v289 = vunpack.c.l.bf16 %v281
      %v290 = vunpack.c.l.bf16 %v282
      %v291 = vunpack.c.l.bf16 %v283
      %v292 = vunpack.c.l.bf16 %v284
      %v293 = vld [vmem:[%s1] sm:$0x1]
      %v295 = vlaneseq
      %v296 = vshrl.u32 %v295, 7
      %v297 = vsub.s32 0, %v296
      %v298 = vrot.slane %v293, %v297
      %v300 = vmul.f32 %v285, %v298
      %v301 = vmul.f32 %v286, %v298
      %v302 = vmul.f32 %v287, %v298
      %v303 = vmul.f32 %v288, %v298
      %v304 = vmul.f32 %v289, %v298
      %v305 = vmul.f32 %v290, %v298
      %v306 = vmul.f32 %v291, %v298
      %v307 = vmul.f32 %v292, %v298
      %v308 = vld [vmem:[%s2] sm:$0x1]
      %v310 = vlaneseq
      %v311 = vshrl.u32 %v310, 7
      %v312 = vsub.s32 0, %v311
      %v313 = vrot.slane %v308, %v312
      %v315 = vadd.f32 %v300, %v313
      %v316 = vadd.f32 %v301, %v313
      %v317 = vadd.f32 %v302, %v313
      %v318 = vadd.f32 %v303, %v313
      %v319 = vadd.f32 %v304, %v313
      %v320 = vadd.f32 %v305, %v313
      %v321 = vadd.f32 %v306, %v313
      %v322 = vadd.f32 %v307, %v313
      %v323 = vld [vmem:[%s269] sm:$0xf]
      %v324 = vld [vmem:[%s269 + $0x4] sm:$0xf]
      %v325 = vld [vmem:[%s269 + $0x8] sm:$0xf]
      %v326 = vld [vmem:[%s269 + $0xc] sm:$0xf]
      %v327 = vld [vmem:[%s269 + $0x10] sm:$0xf]
      %v328 = vld [vmem:[%s269 + $0x14] sm:$0xf]
      %v329 = vld [vmem:[%s269 + $0x18] sm:$0xf]
      %v330 = vld [vmem:[%s269 + $0x1c] sm:$0xf]
      %v331 = vunpack.c.l.bf16 %v323
      %v332 = vunpack.c.l.bf16 %v324
      %v333 = vunpack.c.l.bf16 %v325
      %v334 = vunpack.c.l.bf16 %v326
      %v335 = vunpack.c.l.bf16 %v327
      %v336 = vunpack.c.l.bf16 %v328
      %v337 = vunpack.c.l.bf16 %v329
      %v338 = vunpack.c.l.bf16 %v330
      %v339 = vld [vmem:[%s4] sm:$0x1]
      %v341 = vlaneseq
      %v342 = vshrl.u32 %v341, 7
      %v343 = vsub.s32 0, %v342
      %v344 = vrot.slane %v339, %v343
      %v346 = vmul.f32 %v331, %v344
      %v347 = vmul.f32 %v332, %v344
      %v348 = vmul.f32 %v333, %v344
      %v349 = vmul.f32 %v334, %v344
      %v350 = vmul.f32 %v335, %v344
      %v351 = vmul.f32 %v336, %v344
      %v352 = vmul.f32 %v337, %v344
      %v353 = vmul.f32 %v338, %v344
      %v354 = vadd.f32 %v315, %v346
      %v355 = vadd.f32 %v316, %v347
      %v356 = vadd.f32 %v317, %v348
      %v357 = vadd.f32 %v318, %v349
      %v358 = vadd.f32 %v319, %v350
      %v359 = vadd.f32 %v320, %v351
      %v360 = vadd.f32 %v321, %v352
      %v361 = vadd.f32 %v322, %v353
      %v362 = vld [vmem:[%s5] sm:$0x1]
      %v364 = vlaneseq
      %v365 = vshrl.u32 %v364, 7
      %v366 = vsub.s32 0, %v365
      %v367 = vrot.slane %v362, %v366
      %v369 = vadd.f32 %v354, %v367
      %v370 = vadd.f32 %v355, %v367
      %v371 = vadd.f32 %v356, %v367
      %v372 = vadd.f32 %v357, %v367
      %v373 = vadd.f32 %v358, %v367
      %v374 = vadd.f32 %v359, %v367
      %v375 = vadd.f32 %v360, %v367
      %v376 = vadd.f32 %v361, %v367
      %v377 = vmax.f32 %v369, 0.0
      %v378 = vmax.f32 %v370, 0.0
      %v379 = vmax.f32 %v371, 0.0
      %v380 = vmax.f32 %v372, 0.0
      %v381 = vmax.f32 %v373, 0.0
      %v382 = vmax.f32 %v374, 0.0
      %v383 = vmax.f32 %v375, 0.0
      %v384 = vmax.f32 %v376, 0.0
      %385 = vst [vmem:[%s275] sm:$0xff] %v377
      %386 = vst [vmem:[%s275 + $0x8] sm:$0xff] %v378
      %387 = vst [vmem:[%s275 + $0x10] sm:$0xff] %v379
      %388 = vst [vmem:[%s275 + $0x18] sm:$0xff] %v380
      %389 = vst [vmem:[%s275 + $0x20] sm:$0xff] %v381
      %390 = vst [vmem:[%s275 + $0x28] sm:$0xff] %v382
      %391 = vst [vmem:[%s275 + $0x30] sm:$0xff] %v383
      %392 = vst [vmem:[%s275 + $0x38] sm:$0xff] %v384
      %s393 = smul.u32 8, %s17
      %p394 = scmp.lt.s32.totalorder %s393, 15
      %s395 = scalar_select %p394, %s393, 15
      %s396 = smul.addr %s395, 8
      %s397 = scalar_lea.vmem %s6, %s396
      // Predicated region
      $region45: #{basic_block_forward.9} parent=43 // pred_check
        %p398 = pneg %p171
      $region46: #{basic_block_forward.9} parent=43 // pred_check_branch
        %400 = sbr.rel (%p398) target = $region48
      $region47: #{basic_block_forward.9} parent=43 // pred_region
        %s401 = smul.u32 8, %s17
      $region48: #{basic_block_forward.9} parent=43 // pred_fallthru
        _
    $region44: #{basic_block_forward.9} parent=5 // pred_fallthru
      _
    %p402 = scmp.le.s32.totalorder 2, %s12
    // Predicated region
    $region49: #{basic_block_forward.9} parent=5 // pred_check
      %p403 = pneg %p402
    $region50: #{basic_block_forward.9} parent=5 // pred_check_branch
      %405 = sbr.rel (%p403) target = $region52
    $region51: #{basic_block_forward.9} parent=5 // pred_region
      %s406 = ssub.s32 %s12, 2
      // Predicated region
      $region53: #{basic_block_forward.9} parent=51 // pred_check
        %p407 = pneg %p177
      $region54: #{basic_block_forward.9} parent=51 // pred_check_branch
        %409 = sbr.rel (%p407) target = $region56
      $region55: #{basic_block_forward.9} parent=51 // pred_region
        %s410 = smul.u32 8, %s18
        %p411 = scmp.lt.s32.totalorder %s410, 15
        %s412 = scalar_select %p411, %s410, 15
        %s413 = smul.addr %s412, 8
        %s414 = scalar_lea.vmem %s6, %s413
      $region56: #{basic_block_forward.9} parent=51 // pred_fallthru
        _
    $region52: #{basic_block_forward.9} parent=5 // pred_fallthru
      _
  $region6: #{basic_block_forward.9} parent=0 // loop_footer
    %s16 = sadd.s32 1, %s12
  $region7: #{basic_block_forward.9} parent=0 // loop_footer_branch
    %11 = sbr.rel target = $region3
  $region8: #{basic_block_forward.9} parent=0 // loop_exit
    _

// kernel: basic_block_forward.7
$region0: #{basic_block_forward.7}
  #allocation0 [shape = 'u32[]', space=smem, size = 0x4, offset = 0x4, fixed_abs, tag = 'smem constant byte address 0x4 - core index']
  #allocation1 [shape = 'u32[144,128]{1,0:T(1,128)}', space=vmem, size = 0x12000, scoped, tag = 'internal scratch']
  %s0 = inlined_call_operand.vmem [shape: bf16[128,72], index: 0, kind: input, shape index: {}]
  %s1 = inlined_call_operand.vmem [shape: bf16[72,128], index: 1, kind: input, shape index: {}]
  %s2 = inlined_call_operand.vmem [shape: bf16[128,128], index: 2, kind: output, shape index: {0}]
  %s3 = inlined_call_operand.vmem [shape: f32[2,1,128], index: 3, kind: output, shape index: {1}]
  %s4 = inlined_call_operand.vmem [shape: f32[2,1,128], index: 4, kind: output, shape index: {2}]
  %5 = xla_tuple %s2, %s3, %s4
  %s6 = sld [smem:[#allocation0]]
  $region57: #{basic_block_forward.7} parent=0
    _
  %s8 = ssub.s32 1, %s6
  %s9 = scalar_select 0, %s8, %s6
  loop: start=0, step=1, limit=4
  $region2: #{basic_block_forward.7} parent=0 // loop_pre_header
    _
  $region3: #{basic_block_forward.7} parent=0 // loop_header
    %s11 = sphi 0, %s15
    %p12 = scmp.ge.s32.totalorder %s11, 4
    %s21 = sphi 0, %s23
    %s24 = sphi 0, %s21
    %s25 = sphi 0, %s24
    %s41 = sphi 0, %s25
    %s45 = sphi 0, %s45
    %s47 = sphi 0, %s45
    %s48 = sphi 0, %s47
    %s62 = sphi 0, %s48
    %s68 = sphi 0, %s70
    %s71 = sphi 0, %s68
    %s72 = sphi 0, %s71
    %s88 = sphi 0, %s72
    %s94 = sphi 0, %s96
    %s97 = sphi 0, %s94
    %s98 = sphi 0, %s97
    %s114 = sphi 0, %s98
    %s120 = sphi 0, %s122
    %s123 = sphi 0, %s120
    %s124 = sphi 0, %s123
    %s140 = sphi 0, %s124
  $region4: #{basic_block_forward.7} parent=0 // loop_header_branch
    %14 = sbr.rel (%p12) target = $region8
  $region5: #{basic_block_forward.7} parent=0 // loop_body
    %s16 = ssub.s32 %s11, 1
    %s17 = ssub.s32 %s11, 2
    %s18 = sadd.s32 %s11, 1
    %s19 = ssub.s32 %s11, %s18
    %p20 = scmp.eq.s32.totalorder %s19, 0
    %s22 = sadd.s32 %s21, 1
    %s23 = scalar_select %p20, %s21, %s22
    %p26 = pneg %p20
    %p27 = scmp.eq.s32.totalorder %s11, 1
    %p28 = por %p26, %p27
    %p29 = scmp.ne.s32.totalorder %s21, %s24
    %p30 = scmp.eq.s32.totalorder %s11, 0
    %p31 = por %p29, %p30
    %p32 = scmp.ne.s32.totalorder %s21, %s24
    %p33 = scmp.eq.s32.totalorder %s16, 1
    %p34 = por %p32, %p33
    %p35 = scmp.ne.s32.totalorder %s24, %s25
    %p36 = scmp.eq.s32.totalorder %s16, 0
    %p37 = por %p35, %p36
    %p38 = scmp.ne.s32.totalorder %s24, %s25
    %p39 = scmp.eq.s32.totalorder %s17, 1
    %p40 = por %p38, %p39
    %p42 = scmp.ne.s32.totalorder %s25, %s41
    %p43 = scmp.eq.s32.totalorder %s17, 0
    %p44 = por %p42, %p43
    %s46 = sadd.s32 %s45, 1
    %p49 = scmp.eq.s32.totalorder %s11, 1
    %p50 = scmp.ne.s32.totalorder %s45, %s47
    %p51 = scmp.eq.s32.totalorder %s11, 0
    %p52 = por %p50, %p51
    %p53 = scmp.ne.s32.totalorder %s45, %s47
    %p54 = scmp.eq.s32.totalorder %s16, 1
    %p55 = por %p53, %p54
    %p56 = scmp.ne.s32.totalorder %s47, %s48
    %p57 = scmp.eq.s32.totalorder %s16, 0
    %p58 = por %p56, %p57
    %p59 = scmp.ne.s32.totalorder %s47, %s48
    %p60 = scmp.eq.s32.totalorder %s17, 1
    %p61 = por %p59, %p60
    %p63 = scmp.ne.s32.totalorder %s48, %s62
    %p64 = scmp.eq.s32.totalorder %s17, 0
    %p65 = por %p63, %p64
    %s66 = ssub.s32 %s11, %s18
    %p67 = scmp.eq.s32.totalorder %s66, 0
    %s69 = sadd.s32 %s68, 1
    %s70 = scalar_select %p67, %s68, %s69
    %p73 = pneg %p67
    %p74 = scmp.eq.s32.totalorder %s11, 1
    %p75 = por %p73, %p74
    %p76 = scmp.ne.s32.totalorder %s68, %s71
    %p77 = scmp.eq.s32.totalorder %s11, 0
    %p78 = por %p76, %p77
    %p79 = scmp.ne.s32.totalorder %s68, %s71
    %p80 = scmp.eq.s32.totalorder %s16, 1
    %p81 = por %p79, %p80
    %p82 = scmp.ne.s32.totalorder %s71, %s72
    %p83 = scmp.eq.s32.totalorder %s16, 0
    %p84 = por %p82, %p83
    %p85 = scmp.ne.s32.totalorder %s71, %s72
    %p86 = scmp.eq.s32.totalorder %s17, 1
    %p87 = por %p85, %p86
    %p89 = scmp.ne.s32.totalorder %s72, %s88
    %p90 = scmp.eq.s32.totalorder %s17, 0
    %p91 = por %p89, %p90
    %s92 = ssub.s32 %s11, %s18
    %p93 = scmp.eq.s32.totalorder %s92, 0
    %s95 = sadd.s32 %s94, 1
    %s96 = scalar_select %p93, %s94, %s95
    %p99 = pneg %p93
    %p100 = scmp.eq.s32.totalorder %s11, 1
    %p101 = por %p99, %p100
    %p102 = scmp.ne.s32.totalorder %s94, %s97
    %p103 = scmp.eq.s32.totalorder %s11, 0
    %p104 = por %p102, %p103
    %p105 = scmp.ne.s32.totalorder %s94, %s97
    %p106 = scmp.eq.s32.totalorder %s16, 1
    %p107 = por %p105, %p106
    %p108 = scmp.ne.s32.totalorder %s97, %s98
    %p109 = scmp.eq.s32.totalorder %s16, 0
    %p110 = por %p108, %p109
    %p111 = scmp.ne.s32.totalorder %s97, %s98
    %p112 = scmp.eq.s32.totalorder %s17, 1
    %p113 = por %p111, %p112
    %p115 = scmp.ne.s32.totalorder %s98, %s114
    %p116 = scmp.eq.s32.totalorder %s17, 0
    %p117 = por %p115, %p116
    %s118 = ssub.s32 %s11, %s18
    %p119 = scmp.eq.s32.totalorder %s118, 0
    %s121 = sadd.s32 %s120, 1
    %s122 = scalar_select %p119, %s120, %s121
    %p125 = pneg %p119
    %p126 = scmp.eq.s32.totalorder %s11, 1
    %p127 = por %p125, %p126
    %p128 = scmp.ne.s32.totalorder %s120, %s123
    %p129 = scmp.eq.s32.totalorder %s11, 0
    %p130 = por %p128, %p129
    %p131 = scmp.ne.s32.totalorder %s120, %s123
    %p132 = scmp.eq.s32.totalorder %s16, 1
    %p133 = por %p131, %p132
    %p134 = scmp.ne.s32.totalorder %s123, %s124
    %p135 = scmp.eq.s32.totalorder %s16, 0
    %p136 = por %p134, %p135
    %p137 = scmp.ne.s32.totalorder %s123, %s124
    %p138 = scmp.eq.s32.totalorder %s17, 1
    %p139 = por %p137, %p138
    %p141 = scmp.ne.s32.totalorder %s124, %s140
    %p142 = scmp.eq.s32.totalorder %s17, 0
    %p143 = por %p141, %p142
    %p144 = scmp.le.s32.totalorder 1, %s11
    %p145 = scmp.lt.s32.totalorder %s11, 3
    %p146 = pnand %p144, %p145
    %p147 = pneg %p146
    // Predicated region
    $region9: #{basic_block_forward.7} parent=5 // pred_check
      _
    $region10: #{basic_block_forward.7} parent=5 // pred_check_branch
      %149 = sbr.rel (%p146) target = $region12
    $region11: #{basic_block_forward.7} parent=5 // pred_region
      %s150 = ssub.s32 %s11, 1
      // Predicated region
      $region13: #{basic_block_forward.7} parent=11 // pred_check
        %p151 = pneg %p58
      $region14: #{basic_block_forward.7} parent=11 // pred_check_branch
        %153 = sbr.rel (%p151) target = $region16
      $region15: #{basic_block_forward.7} parent=11 // pred_region
        _
      $region16: #{basic_block_forward.7} parent=11 // pred_fallthru
        _
    $region12: #{basic_block_forward.7} parent=5 // pred_fallthru
      _
    %p154 = scmp.lt.s32.totalorder %s11, 2
    // Predicated region
    $region17: #{basic_block_forward.7} parent=5 // pred_check
      %p155 = pneg %p154
    $region18: #{basic_block_forward.7} parent=5 // pred_check_branch
      %157 = sbr.rel (%p155) target = $region20
    $region19: #{basic_block_forward.7} parent=5 // pred_region
      // Predicated region
      $region21: #{basic_block_forward.7} parent=19 // pred_check
        %p158 = pneg %p31
      $region22: #{basic_block_forward.7} parent=19 // pred_check_branch
        %160 = sbr.rel (%p158) target = $region24
      $region23: #{basic_block_forward.7} parent=19 // pred_region
        %s161 = smul.u32 8, %s11
        %p162 = scmp.lt.s32.totalorder %s161, 15
        %s163 = scalar_select %p162, %s161, 15
        %s164 = smul.addr %s163, 4
        %s165 = scalar_lea.vmem %s0, %s164
        %s166 = smul.u32 8, %s11
      $region24: #{basic_block_forward.7} parent=19 // pred_fallthru
        _
    $region20: #{basic_block_forward.7} parent=5 // pred_fallthru
      _
    %p167 = scmp.le.s32.totalorder 1, %s11
    %p168 = scmp.lt.s32.totalorder %s11, 3
    %p169 = pnand %p167, %p168
    %p170 = pneg %p169
    // Predicated region
    $region25: #{basic_block_forward.7} parent=5 // pred_check
      _
    $region26: #{basic_block_forward.7} parent=5 // pred_check_branch
      %172 = sbr.rel (%p169) target = $region28
    $region27: #{basic_block_forward.7} parent=5 // pred_region
      %s173 = ssub.s32 %s11, 1
      %s174 = smul.u32 8, %s16
      %p175 = scmp.lt.s32.totalorder %s174, 15
      %s176 = scalar_select %p175, %s174, 15
      %s177 = smul.addr %s176, 4
      %s178 = scalar_lea.vmem %s0, %s177
      %p179 = pneg %p37
      %p180 = pneg %p34
      %p181 = pneg %p58
      %p182 = pneg %p55
      %p183 = pneg %p84
      %p184 = pneg %p81
      %s185 = smul.u32 8, %s16
      %p186 = scmp.lt.s32.totalorder %s185, 15
      %s187 = scalar_select %p186, %s185, 15
      %s188 = smul.addr %s187, 4
      %s189 = scalar_lea.vmem %s2, %s188
      %p190 = pneg %p110
      %p191 = pneg %p107
      %p192 = scmp.lt.s32.totalorder %s16, 1
      %s193 = scalar_select %p192, %s16, 1
      %s194 = scalar_lea.vmem %s3, %s193
      %p195 = pneg %p136
      %p196 = pneg %p133
      %p197 = scmp.lt.s32.totalorder %s16, 1
      %s198 = scalar_select %p197, %s16, 1
      %s199 = scalar_lea.vmem %s4, %s198
      %s200 = smul.u32 8, %s16
      %p201 = scmp.lt.s32.totalorder %s200, 15
      %s202 = scalar_select %p201, %s200, 15
      %s203 = smul.addr %s202, 4
      %s204 = scalar_lea.vmem %s0, %s203
      %s205 = smul.u32 8, %s16
      %s206 = smul.u32 8, %s16
      %p207 = scmp.lt.s32.totalorder %s206, 15
      %s208 = scalar_select %p207, %s206, 15
      %s209 = smul.addr %s208, 4
      %s210 = scalar_lea.vmem %s2, %s209
      %s211 = smul.u32 8, %s16
      %p212 = scmp.lt.s32.totalorder %s16, 1
      %s213 = scalar_select %p212, %s16, 1
      %s214 = scalar_lea.vmem %s3, %s213
      %p215 = scmp.lt.s32.totalorder %s16, 1
      %s216 = scalar_select %p215, %s16, 1
      %s217 = scalar_lea.vmem %s4, %s216
      %v219 = vld [vmem:[%s204] sm:$0xf]
      %v220 = vld [vmem:[%s204 + $0x4] sm:$0xf]
      %v221 = vld [vmem:[%s204 + $0x8] sm:$0xf]
      %v222 = vld [vmem:[%s204 + $0xc] sm:$0xf]
      %v223 = vld [vmem:[%s204 + $0x10] sm:$0xf]
      %v224 = vld [vmem:[%s204 + $0x14] sm:$0xf]
      %v225 = vld [vmem:[%s204 + $0x18] sm:$0xf]
      %v226 = vld [vmem:[%s204 + $0x1c] sm:$0xf]
      %v227 = vld [vmem:[%s1] sm:$0xf]
      %v228 = vld [vmem:[%s1 + $0x4] sm:$0xf]
      %v229 = vld [vmem:[%s1 + $0x8] sm:$0xf]
      %v230 = vld [vmem:[%s1 + $0xc] sm:$0xf]
      %v231 = vld [vmem:[%s1 + $0x10] sm:$0xf]
      %v232 = vld [vmem:[%s1 + $0x14] sm:$0xf]
      %v233 = vld [vmem:[%s1 + $0x18] sm:$0xf]
      %v234 = vld [vmem:[%s1 + $0x1c] sm:$0xf]
      %v235 = vld [vmem:[%s1 + $0x20] sm:$0xf]
      %v244 = vunpack.c.l.b16 %v219
      %v245 = vunpack.c.l.b16 %v220
      %v246 = vunpack.c.l.b16 %v221
      %v247 = vunpack.c.l.b16 %v222
      %v248 = vunpack.c.l.b16 %v223
      %v249 = vunpack.c.l.b16 %v224
      %v250 = vunpack.c.l.b16 %v225
      %v251 = vunpack.c.l.b16 %v226
      %v252 = vpack.c.b16 %v245, %v244
      %v253 = vpack.c.b16 %v247, %v246
      %v254 = vpack.c.b16 %v249, %v248
      %v255 = vpack.c.b16 %v251, %v250
      %v265 = vunpack.c.l.b16 %v227
      %v266 = vunpack.c.l.b16 %v228
      %v267 = vunpack.c.l.b16 %v229
      %v268 = vunpack.c.l.b16 %v230
      %v269 = vunpack.c.l.b16 %v231
      %v270 = vunpack.c.l.b16 %v232
      %v271 = vunpack.c.l.b16 %v233
      %v272 = vunpack.c.l.b16 %v234
      %v273 = vunpack.c.l.b16 %v235
      %v274 = vpack.c.b16 %v266, %v265
      %v275 = vpack.c.b16 %v268, %v267
      %v276 = vpack.c.b16 %v270, %v269
      %v277 = vpack.c.b16 %v272, %v271
      %v278 = vpack.c.b16 %v273, %v273
      %vm283 = vcmask 588800
      %v285 = vsel %vm283, %v252, 0
      %v288 = vsel %vm283, %v253, 0
      %v291 = vsel %vm283, %v254, 0
      %v294 = vsel %vm283, %v255, 0
      %vm296 = vcmask 1043456
      %v298 = vsel %vm296, %v278, 0
      %300 = vmatprep.subr.bf16.mxu0 0
      %301 = vmatpush1.bf16.msra.mxu0 %v274
      %302 = vmatprep.subr.bf16.mxu0 0
      %303 = vmatpush1.bf16.msra.mxu0 %v275
      %304 = vmatprep.subr.bf16.mxu0 0
      %305 = vmatpush1.bf16.msra.mxu0 %v276
      %306 = vmatprep.subr.bf16.mxu0 0
      %307 = vmatpush1.bf16.msra.mxu0 %v277
      %308 = vmatprep.subr.bf16.mxu0 0
      %309 = vmatpush1.bf16.msra.mxu0 %v298
      %310 = vmatprep.subr.bf16.mxu0 0
      %311 = vmatpush1.bf16.msra.mxu0 0
      %312 = vmatprep.subr.bf16.mxu0 0
      %313 = vmatpush1.bf16.msra.mxu0 0
      %314 = vmatprep.subr.bf16.mxu0 0
      %315 = vmatpush1.bf16.msra.mxu0 0
      %316 = vmatprep.subr.bf16.mxu0 0
      %317 = vmatpush1.bf16.msra.mxu0 0
      %318 = vmatprep.subr.bf16.mxu0 0
      %319 = vmatpush1.bf16.msra.mxu0 0
      %320 = vmatprep.subr.bf16.mxu0 0
      %321 = vmatpush1.bf16.msra.mxu0 0
      %322 = vmatprep.subr.bf16.mxu0 0
      %323 = vmatpush1.bf16.msra.mxu0 0
      %324 = vmatprep.subr.bf16.mxu0 0
      %325 = vmatpush1.bf16.msra.mxu0 0
      %326 = vmatprep.subr.bf16.mxu0 0
      %327 = vmatpush1.bf16.msra.mxu0 0
      %328 = vmatprep.subr.bf16.mxu0 0
      %329 = vmatpush1.bf16.msra.mxu0 0
      %330 = vmatprep.subr.bf16.mxu0 0
      %331 = vmatpush1.bf16.msra.mxu0 0
      %332 = vmatprep.mubr.bf16.mxu0 0
      %333 = vmatmul.mubr.bf16.gmra.mrb[0].mxu0 %v285
      %v334 = vpop.f32.mrb[0].mxu0
      %v335 = vadd.f32 0.0, %v334
      %v336 = vpop.f32.mrb[0].mxu0
      %v337 = vpop.f32.mrb[0].mxu0
      %v338 = vadd.f32 0.0, %v337
      %v339 = vpop.f32.mrb[0].mxu0
      %340 = vmatprep.mubr.bf16.mxu0 0
      %341 = vmatmul.mubr.bf16.gmra.mrb[0].mxu0 %v288
      %v342 = vpop.f32.mrb[0].mxu0
      %v343 = vadd.f32 0.0, %v342
      %v344 = vpop.f32.mrb[0].mxu0
      %v345 = vpop.f32.mrb[0].mxu0
      %v346 = vadd.f32 0.0, %v345
      %v347 = vpop.f32.mrb[0].mxu0
      %348 = vmatprep.mubr.bf16.mxu0 0
      %349 = vmatmul.mubr.bf16.gmra.mrb[0].mxu0 %v291
      %v350 = vpop.f32.mrb[0].mxu0
      %v351 = vadd.f32 0.0, %v350
      %v352 = vpop.f32.mrb[0].mxu0
      %v353 = vpop.f32.mrb[0].mxu0
      %v354 = vadd.f32 0.0, %v353
      %v355 = vpop.f32.mrb[0].mxu0
      %356 = vmatprep.mubr.bf16.mxu0 0
      %357 = vmatmul.mubr.bf16.gmra.mrb[0].mxu0 %v294
      %v358 = vpop.f32.mrb[0].mxu0
      %v359 = vadd.f32 0.0, %v358
      %v360 = vpop.f32.mrb[0].mxu0
      %v361 = vpop.f32.mrb[0].mxu0
      %v362 = vadd.f32 0.0, %v361
      %v363 = vpop.f32.mrb[0].mxu0
      %364 = vdwg.mxu0
      %v365 = vpack.c.bf16 %v338, %v335
      %v366 = vpack.c.bf16 %v346, %v343
      %v367 = vpack.c.bf16 %v354, %v351
      %v368 = vpack.c.bf16 %v362, %v359
      %v373 = vunpack.c.l.b16 %v365
      %v374 = vunpack.c.h.b16 %v365
      %v375 = vunpack.c.l.b16 %v366
      %v376 = vunpack.c.h.b16 %v366
      %v377 = vunpack.c.l.b16 %v367
      %v378 = vunpack.c.h.b16 %v367
      %v379 = vunpack.c.l.b16 %v368
      %v380 = vunpack.c.h.b16 %v368
      %v381 = vpack.c.b16 %v373, %v373
      %v382 = vpack.c.b16 %v374, %v374
      %v383 = vpack.c.b16 %v375, %v375
      %v384 = vpack.c.b16 %v376, %v376
      %v385 = vpack.c.b16 %v377, %v377
      %v386 = vpack.c.b16 %v378, %v378
      %v387 = vpack.c.b16 %v379, %v379
      %v388 = vpack.c.b16 %v380, %v380
      %397 = vst [vmem:[%s210] sm:$0xf] %v381
      %398 = vst [vmem:[%s210 + $0x4] sm:$0xf] %v382
      %399 = vst [vmem:[%s210 + $0x8] sm:$0xf] %v383
      %400 = vst [vmem:[%s210 + $0xc] sm:$0xf] %v384
      %401 = vst [vmem:[%s210 + $0x10] sm:$0xf] %v385
      %402 = vst [vmem:[%s210 + $0x14] sm:$0xf] %v386
      %403 = vst [vmem:[%s210 + $0x18] sm:$0xf] %v387
      %404 = vst [vmem:[%s210 + $0x1c] sm:$0xf] %v388
      %v405 = vadd.f32 %v335, %v338
      %v406 = vadd.f32 %v405, %v343
      %v407 = vadd.f32 %v406, %v346
      %v408 = vadd.f32 %v407, %v351
      %v409 = vadd.f32 %v408, %v354
      %v410 = vadd.f32 %v409, %v359
      %v411 = vadd.f32 %v410, %v362
      %v412 = vrot.slane %v411, 4
      %v413 = vadd.f32 %v411, %v412
      %v414 = vrot.slane %v413, 2
      %v415 = vadd.f32 %v413, %v414
      %v416 = vrot.slane %v415, 1
      %v417 = vadd.f32 %v415, %v416
      %418 = vst [vmem:[%s214] sm:$0x1] %v417
      %v419 = vmul.f32 %v335, %v335
      %v420 = vmul.f32 %v338, %v338
      %v421 = vmul.f32 %v343, %v343
      %v422 = vmul.f32 %v346, %v346
      %v423 = vmul.f32 %v351, %v351
      %v424 = vmul.f32 %v354, %v354
      %v425 = vmul.f32 %v359, %v359
      %v426 = vmul.f32 %v362, %v362
      %v427 = vadd.f32 %v419, %v420
      %v428 = vadd.f32 %v427, %v421
      %v429 = vadd.f32 %v428, %v422
      %v430 = vadd.f32 %v429, %v423
      %v431 = vadd.f32 %v430, %v424
      %v432 = vadd.f32 %v431, %v425
      %v433 = vadd.f32 %v432, %v426
      %v434 = vrot.slane %v433, 4
      %v435 = vadd.f32 %v433, %v434
      %v436 = vrot.slane %v435, 2
      %v437 = vadd.f32 %v435, %v436
      %v438 = vrot.slane %v437, 1
      %v439 = vadd.f32 %v437, %v438
      %440 = vst [vmem:[%s217] sm:$0x1] %v439
      %s441 = smul.u32 8, %s16
      %p442 = scmp.lt.s32.totalorder %s441, 15
      %s443 = scalar_select %p442, %s441, 15
      %s444 = smul.addr %s443, 4
      %s445 = scalar_lea.vmem %s2, %s444
      %p446 = scmp.lt.s32.totalorder %s16, 1
      %s447 = scalar_select %p446, %s16, 1
      %s448 = scalar_lea.vmem %s3, %s447
      %p449 = scmp.lt.s32.totalorder %s16, 1
      %s450 = scalar_select %p449, %s16, 1
      %s451 = scalar_lea.vmem %s4, %s450
      // Predicated region
      $region29: #{basic_block_forward.7} parent=27 // pred_check
        %p452 = pneg %p81
      $region30: #{basic_block_forward.7} parent=27 // pred_check_branch
        %454 = sbr.rel (%p452) target = $region32
      $region31: #{basic_block_forward.7} parent=27 // pred_region
        %s455 = smul.u32 8, %s16
      $region32: #{basic_block_forward.7} parent=27 // pred_fallthru
        _
      // Predicated region
      $region33: #{basic_block_forward.7} parent=27 // pred_check
        %p456 = pneg %p107
      $region34: #{basic_block_forward.7} parent=27 // pred_check_branch
        %458 = sbr.rel (%p456) target = $region36
      $region35: #{basic_block_forward.7} parent=27 // pred_region
        _
      $region36: #{basic_block_forward.7} parent=27 // pred_fallthru
        _
      // Predicated region
      $region37: #{basic_block_forward.7} parent=27 // pred_check
        %p459 = pneg %p133
      $region38: #{basic_block_forward.7} parent=27 // pred_check_branch
        %461 = sbr.rel (%p459) target = $region40
      $region39: #{basic_block_forward.7} parent=27 // pred_region
        _
      $region40: #{basic_block_forward.7} parent=27 // pred_fallthru
        _
    $region28: #{basic_block_forward.7} parent=5 // pred_fallthru
      _
    %p462 = scmp.le.s32.totalorder 2, %s11
    // Predicated region
    $region41: #{basic_block_forward.7} parent=5 // pred_check
      %p463 = pneg %p462
    $region42: #{basic_block_forward.7} parent=5 // pred_check_branch
      %465 = sbr.rel (%p463) target = $region44
    $region43: #{basic_block_forward.7} parent=5 // pred_region
      %s466 = ssub.s32 %s11, 2
      // Predicated region
      $region45: #{basic_block_forward.7} parent=43 // pred_check
        %p467 = pneg %p87
      $region46: #{basic_block_forward.7} parent=43 // pred_check_branch
        %469 = sbr.rel (%p467) target = $region48
      $region47: #{basic_block_forward.7} parent=43 // pred_region
        %s470 = smul.u32 8, %s17
        %p471 = scmp.lt.s32.totalorder %s470, 15
        %s472 = scalar_select %p471, %s470, 15
        %s473 = smul.addr %s472, 4
        %s474 = scalar_lea.vmem %s2, %s473
      $region48: #{basic_block_forward.7} parent=43 // pred_fallthru
        _
      // Predicated region
      $region49: #{basic_block_forward.7} parent=43 // pred_check
        %p475 = pneg %p113
      $region50: #{basic_block_forward.7} parent=43 // pred_check_branch
        %477 = sbr.rel (%p475) target = $region52
      $region51: #{basic_block_forward.7} parent=43 // pred_region
        %p478 = scmp.lt.s32.totalorder %s17, 1
        %s479 = scalar_select %p478, %s17, 1
        %s480 = scalar_lea.vmem %s3, %s479
      $region52: #{basic_block_forward.7} parent=43 // pred_fallthru
        _
      // Predicated region
      $region53: #{basic_block_forward.7} parent=43 // pred_check
        %p481 = pneg %p139
      $region54: #{basic_block_forward.7} parent=43 // pred_check_branch
        %483 = sbr.rel (%p481) target = $region56
      $region55: #{basic_block_forward.7} parent=43 // pred_region
        %p484 = scmp.lt.s32.totalorder %s17, 1
        %s485 = scalar_select %p484, %s17, 1
        %s486 = scalar_lea.vmem %s4, %s485
      $region56: #{basic_block_forward.7} parent=43 // pred_fallthru
        _
    $region44: #{basic_block_forward.7} parent=5 // pred_fallthru
      _
  $region6: #{basic_block_forward.7} parent=0 // loop_footer
    %s15 = sadd.s32 1, %s11
  $region7: #{basic_block_forward.7} parent=0 // loop_footer_branch
    %10 = sbr.rel target = $region3
  $region8: #{basic_block_forward.7} parent=0 // loop_exit
    _

// kernel: basic_block_forward.8
$region0: #{basic_block_forward.8}
  #allocation0 [shape = 'u32[]', space=smem, size = 0x4, offset = 0x4, fixed_abs, tag = 'smem constant byte address 0x4 - core index']
  #allocation1 [shape = 'u32[144,128]{1,0:T(1,128)}', space=vmem, size = 0x12000, scoped, tag = 'internal scratch']
  %s0 = inlined_call_operand.vmem [shape: bf16[128,4], index: 0, kind: input, shape index: {}]
  %s1 = inlined_call_operand.vmem [shape: bf16[4,128], index: 1, kind: input, shape index: {}]
  %s2 = inlined_call_operand.vmem [shape: bf16[128,128], index: 2, kind: output, shape index: {0}]
  %s3 = inlined_call_operand.vmem [shape: f32[2,1,128], index: 3, kind: output, shape index: {1}]
  %s4 = inlined_call_operand.vmem [shape: f32[2,1,128], index: 4, kind: output, shape index: {2}]
  %5 = xla_tuple %s2, %s3, %s4
  %s6 = sld [smem:[#allocation0]]
  $region57: #{basic_block_forward.8} parent=0
    _
  %s8 = ssub.s32 1, %s6
  %s9 = scalar_select 0, %s8, %s6
  loop: start=0, step=1, limit=4
  $region2: #{basic_block_forward.8} parent=0 // loop_pre_header
    _
  $region3: #{basic_block_forward.8} parent=0 // loop_header
    %s11 = sphi 0, %s15
    %p12 = scmp.ge.s32.totalorder %s11, 4
    %s21 = sphi 0, %s23
    %s24 = sphi 0, %s21
    %s25 = sphi 0, %s24
    %s41 = sphi 0, %s25
    %s45 = sphi 0, %s45
    %s47 = sphi 0, %s45
    %s48 = sphi 0, %s47
    %s62 = sphi 0, %s48
    %s68 = sphi 0, %s70
    %s71 = sphi 0, %s68
    %s72 = sphi 0, %s71
    %s88 = sphi 0, %s72
    %s94 = sphi 0, %s96
    %s97 = sphi 0, %s94
    %s98 = sphi 0, %s97
    %s114 = sphi 0, %s98
    %s120 = sphi 0, %s122
    %s123 = sphi 0, %s120
    %s124 = sphi 0, %s123
    %s140 = sphi 0, %s124
  $region4: #{basic_block_forward.8} parent=0 // loop_header_branch
    %14 = sbr.rel (%p12) target = $region8
  $region5: #{basic_block_forward.8} parent=0 // loop_body
    %s16 = ssub.s32 %s11, 1
    %s17 = ssub.s32 %s11, 2
    %s18 = sadd.s32 %s11, 1
    %s19 = ssub.s32 %s11, %s18
    %p20 = scmp.eq.s32.totalorder %s19, 0
    %s22 = sadd.s32 %s21, 1
    %s23 = scalar_select %p20, %s21, %s22
    %p26 = pneg %p20
    %p27 = scmp.eq.s32.totalorder %s11, 1
    %p28 = por %p26, %p27
    %p29 = scmp.ne.s32.totalorder %s21, %s24
    %p30 = scmp.eq.s32.totalorder %s11, 0
    %p31 = por %p29, %p30
    %p32 = scmp.ne.s32.totalorder %s21, %s24
    %p33 = scmp.eq.s32.totalorder %s16, 1
    %p34 = por %p32, %p33
    %p35 = scmp.ne.s32.totalorder %s24, %s25
    %p36 = scmp.eq.s32.totalorder %s16, 0
    %p37 = por %p35, %p36
    %p38 = scmp.ne.s32.totalorder %s24, %s25
    %p39 = scmp.eq.s32.totalorder %s17, 1
    %p40 = por %p38, %p39
    %p42 = scmp.ne.s32.totalorder %s25, %s41
    %p43 = scmp.eq.s32.totalorder %s17, 0
    %p44 = por %p42, %p43
    %s46 = sadd.s32 %s45, 1
    %p49 = scmp.eq.s32.totalorder %s11, 1
    %p50 = scmp.ne.s32.totalorder %s45, %s47
    %p51 = scmp.eq.s32.totalorder %s11, 0
    %p52 = por %p50, %p51
    %p53 = scmp.ne.s32.totalorder %s45, %s47
    %p54 = scmp.eq.s32.totalorder %s16, 1
    %p55 = por %p53, %p54
    %p56 = scmp.ne.s32.totalorder %s47, %s48
    %p57 = scmp.eq.s32.totalorder %s16, 0
    %p58 = por %p56, %p57
    %p59 = scmp.ne.s32.totalorder %s47, %s48
    %p60 = scmp.eq.s32.totalorder %s17, 1
    %p61 = por %p59, %p60
    %p63 = scmp.ne.s32.totalorder %s48, %s62
    %p64 = scmp.eq.s32.totalorder %s17, 0
    %p65 = por %p63, %p64
    %s66 = ssub.s32 %s11, %s18
    %p67 = scmp.eq.s32.totalorder %s66, 0
    %s69 = sadd.s32 %s68, 1
    %s70 = scalar_select %p67, %s68, %s69
    %p73 = pneg %p67
    %p74 = scmp.eq.s32.totalorder %s11, 1
    %p75 = por %p73, %p74
    %p76 = scmp.ne.s32.totalorder %s68, %s71
    %p77 = scmp.eq.s32.totalorder %s11, 0
    %p78 = por %p76, %p77
    %p79 = scmp.ne.s32.totalorder %s68, %s71
    %p80 = scmp.eq.s32.totalorder %s16, 1
    %p81 = por %p79, %p80
    %p82 = scmp.ne.s32.totalorder %s71, %s72
    %p83 = scmp.eq.s32.totalorder %s16, 0
    %p84 = por %p82, %p83
    %p85 = scmp.ne.s32.totalorder %s71, %s72
    %p86 = scmp.eq.s32.totalorder %s17, 1
    %p87 = por %p85, %p86
    %p89 = scmp.ne.s32.totalorder %s72, %s88
    %p90 = scmp.eq.s32.totalorder %s17, 0
    %p91 = por %p89, %p90
    %s92 = ssub.s32 %s11, %s18
    %p93 = scmp.eq.s32.totalorder %s92, 0
    %s95 = sadd.s32 %s94, 1
    %s96 = scalar_select %p93, %s94, %s95
    %p99 = pneg %p93
    %p100 = scmp.eq.s32.totalorder %s11, 1
    %p101 = por %p99, %p100
    %p102 = scmp.ne.s32.totalorder %s94, %s97
    %p103 = scmp.eq.s32.totalorder %s11, 0
    %p104 = por %p102, %p103
    %p105 = scmp.ne.s32.totalorder %s94, %s97
    %p106 = scmp.eq.s32.totalorder %s16, 1
    %p107 = por %p105, %p106
    %p108 = scmp.ne.s32.totalorder %s97, %s98
    %p109 = scmp.eq.s32.totalorder %s16, 0
    %p110 = por %p108, %p109
    %p111 = scmp.ne.s32.totalorder %s97, %s98
    %p112 = scmp.eq.s32.totalorder %s17, 1
    %p113 = por %p111, %p112
    %p115 = scmp.ne.s32.totalorder %s98, %s114
    %p116 = scmp.eq.s32.totalorder %s17, 0
    %p117 = por %p115, %p116
    %s118 = ssub.s32 %s11, %s18
    %p119 = scmp.eq.s32.totalorder %s118, 0
    %s121 = sadd.s32 %s120, 1
    %s122 = scalar_select %p119, %s120, %s121
    %p125 = pneg %p119
    %p126 = scmp.eq.s32.totalorder %s11, 1
    %p127 = por %p125, %p126
    %p128 = scmp.ne.s32.totalorder %s120, %s123
    %p129 = scmp.eq.s32.totalorder %s11, 0
    %p130 = por %p128, %p129
    %p131 = scmp.ne.s32.totalorder %s120, %s123
    %p132 = scmp.eq.s32.totalorder %s16, 1
    %p133 = por %p131, %p132
    %p134 = scmp.ne.s32.totalorder %s123, %s124
    %p135 = scmp.eq.s32.totalorder %s16, 0
    %p136 = por %p134, %p135
    %p137 = scmp.ne.s32.totalorder %s123, %s124
    %p138 = scmp.eq.s32.totalorder %s17, 1
    %p139 = por %p137, %p138
    %p141 = scmp.ne.s32.totalorder %s124, %s140
    %p142 = scmp.eq.s32.totalorder %s17, 0
    %p143 = por %p141, %p142
    %p144 = scmp.le.s32.totalorder 1, %s11
    %p145 = scmp.lt.s32.totalorder %s11, 3
    %p146 = pnand %p144, %p145
    %p147 = pneg %p146
    // Predicated region
    $region9: #{basic_block_forward.8} parent=5 // pred_check
      _
    $region10: #{basic_block_forward.8} parent=5 // pred_check_branch
      %149 = sbr.rel (%p146) target = $region12
    $region11: #{basic_block_forward.8} parent=5 // pred_region
      %s150 = ssub.s32 %s11, 1
      // Predicated region
      $region13: #{basic_block_forward.8} parent=11 // pred_check
        %p151 = pneg %p58
      $region14: #{basic_block_forward.8} parent=11 // pred_check_branch
        %153 = sbr.rel (%p151) target = $region16
      $region15: #{basic_block_forward.8} parent=11 // pred_region
        _
      $region16: #{basic_block_forward.8} parent=11 // pred_fallthru
        _
    $region12: #{basic_block_forward.8} parent=5 // pred_fallthru
      _
    %p154 = scmp.lt.s32.totalorder %s11, 2
    // Predicated region
    $region17: #{basic_block_forward.8} parent=5 // pred_check
      %p155 = pneg %p154
    $region18: #{basic_block_forward.8} parent=5 // pred_check_branch
      %157 = sbr.rel (%p155) target = $region20
    $region19: #{basic_block_forward.8} parent=5 // pred_region
      // Predicated region
      $region21: #{basic_block_forward.8} parent=19 // pred_check
        %p158 = pneg %p31
      $region22: #{basic_block_forward.8} parent=19 // pred_check_branch
        %160 = sbr.rel (%p158) target = $region24
      $region23: #{basic_block_forward.8} parent=19 // pred_region
        %s161 = smul.u32 8, %s11
        %p162 = scmp.lt.s32.totalorder %s161, 15
        %s163 = scalar_select %p162, %s161, 15
        %s164 = smul.addr %s163, 4
        %s165 = scalar_lea.vmem %s0, %s164
        %s166 = smul.u32 8, %s11
      $region24: #{basic_block_forward.8} parent=19 // pred_fallthru
        _
    $region20: #{basic_block_forward.8} parent=5 // pred_fallthru
      _
    %p167 = scmp.le.s32.totalorder 1, %s11
    %p168 = scmp.lt.s32.totalorder %s11, 3
    %p169 = pnand %p167, %p168
    %p170 = pneg %p169
    // Predicated region
    $region25: #{basic_block_forward.8} parent=5 // pred_check
      _
    $region26: #{basic_block_forward.8} parent=5 // pred_check_branch
      %172 = sbr.rel (%p169) target = $region28
    $region27: #{basic_block_forward.8} parent=5 // pred_region
      %s173 = ssub.s32 %s11, 1
      %s174 = smul.u32 8, %s16
      %p175 = scmp.lt.s32.totalorder %s174, 15
      %s176 = scalar_select %p175, %s174, 15
      %s177 = smul.addr %s176, 4
      %s178 = scalar_lea.vmem %s0, %s177
      %p179 = pneg %p37
      %p180 = pneg %p34
      %p181 = pneg %p58
      %p182 = pneg %p55
      %p183 = pneg %p84
      %p184 = pneg %p81
      %s185 = smul.u32 8, %s16
      %p186 = scmp.lt.s32.totalorder %s185, 15
      %s187 = scalar_select %p186, %s185, 15
      %s188 = smul.addr %s187, 4
      %s189 = scalar_lea.vmem %s2, %s188
      %p190 = pneg %p110
      %p191 = pneg %p107
      %p192 = scmp.lt.s32.totalorder %s16, 1
      %s193 = scalar_select %p192, %s16, 1
      %s194 = scalar_lea.vmem %s3, %s193
      %p195 = pneg %p136
      %p196 = pneg %p133
      %p197 = scmp.lt.s32.totalorder %s16, 1
      %s198 = scalar_select %p197, %s16, 1
      %s199 = scalar_lea.vmem %s4, %s198
      %s200 = smul.u32 8, %s16
      %p201 = scmp.lt.s32.totalorder %s200, 15
      %s202 = scalar_select %p201, %s200, 15
      %s203 = smul.addr %s202, 4
      %s204 = scalar_lea.vmem %s0, %s203
      %s205 = smul.u32 8, %s16
      %s206 = smul.u32 8, %s16
      %p207 = scmp.lt.s32.totalorder %s206, 15
      %s208 = scalar_select %p207, %s206, 15
      %s209 = smul.addr %s208, 4
      %s210 = scalar_lea.vmem %s2, %s209
      %s211 = smul.u32 8, %s16
      %p212 = scmp.lt.s32.totalorder %s16, 1
      %s213 = scalar_select %p212, %s16, 1
      %s214 = scalar_lea.vmem %s3, %s213
      %p215 = scmp.lt.s32.totalorder %s16, 1
      %s216 = scalar_select %p215, %s16, 1
      %s217 = scalar_lea.vmem %s4, %s216
      %v219 = vld [vmem:[%s204] sm:$0xf]
      %v220 = vld [vmem:[%s204 + $0x4] sm:$0xf]
      %v221 = vld [vmem:[%s204 + $0x8] sm:$0xf]
      %v222 = vld [vmem:[%s204 + $0xc] sm:$0xf]
      %v223 = vld [vmem:[%s204 + $0x10] sm:$0xf]
      %v224 = vld [vmem:[%s204 + $0x14] sm:$0xf]
      %v225 = vld [vmem:[%s204 + $0x18] sm:$0xf]
      %v226 = vld [vmem:[%s204 + $0x1c] sm:$0xf]
      %v227 = vld [vmem:[%s1] sm:$0x3]
      %v236 = vunpack.c.l.b16 %v219
      %v237 = vunpack.c.l.b16 %v220
      %v238 = vunpack.c.l.b16 %v221
      %v239 = vunpack.c.l.b16 %v222
      %v240 = vunpack.c.l.b16 %v223
      %v241 = vunpack.c.l.b16 %v224
      %v242 = vunpack.c.l.b16 %v225
      %v243 = vunpack.c.l.b16 %v226
      %v244 = vpack.c.b16 %v237, %v236
      %v245 = vpack.c.b16 %v239, %v238
      %v246 = vpack.c.b16 %v241, %v240
      %v247 = vpack.c.b16 %v243, %v242
      %vm248 = vcmask 31744
      %v250 = vsel %vm248, %v244, 0
      %v253 = vsel %vm248, %v245, 0
      %v256 = vsel %vm248, %v246, 0
      %v259 = vsel %vm248, %v247, 0
      %vm261 = vcmask 1041408
      %v263 = vsel %vm261, %v227, 0
      %265 = vmatprep.subr.bf16.mxu0 0
      %266 = vmatpush1.bf16.msra.mxu0 %v263
      %267 = vmatprep.subr.bf16.mxu0 0
      %268 = vmatpush1.bf16.msra.mxu0 0
      %269 = vmatprep.subr.bf16.mxu0 0
      %270 = vmatpush1.bf16.msra.mxu0 0
      %271 = vmatprep.subr.bf16.mxu0 0
      %272 = vmatpush1.bf16.msra.mxu0 0
      %273 = vmatprep.subr.bf16.mxu0 0
      %274 = vmatpush1.bf16.msra.mxu0 0
      %275 = vmatprep.subr.bf16.mxu0 0
      %276 = vmatpush1.bf16.msra.mxu0 0
      %277 = vmatprep.subr.bf16.mxu0 0
      %278 = vmatpush1.bf16.msra.mxu0 0
      %279 = vmatprep.subr.bf16.mxu0 0
      %280 = vmatpush1.bf16.msra.mxu0 0
      %281 = vmatprep.subr.bf16.mxu0 0
      %282 = vmatpush1.bf16.msra.mxu0 0
      %283 = vmatprep.subr.bf16.mxu0 0
      %284 = vmatpush1.bf16.msra.mxu0 0
      %285 = vmatprep.subr.bf16.mxu0 0
      %286 = vmatpush1.bf16.msra.mxu0 0
      %287 = vmatprep.subr.bf16.mxu0 0
      %288 = vmatpush1.bf16.msra.mxu0 0
      %289 = vmatprep.subr.bf16.mxu0 0
      %290 = vmatpush1.bf16.msra.mxu0 0
      %291 = vmatprep.subr.bf16.mxu0 0
      %292 = vmatpush1.bf16.msra.mxu0 0
      %293 = vmatprep.subr.bf16.mxu0 0
      %294 = vmatpush1.bf16.msra.mxu0 0
      %295 = vmatprep.subr.bf16.mxu0 0
      %296 = vmatpush1.bf16.msra.mxu0 0
      %297 = vmatprep.mubr.bf16.mxu0 0
      %298 = vmatmul.mubr.bf16.gmra.mrb[0].mxu0 %v250
      %v299 = vpop.f32.mrb[0].mxu0
      %v300 = vadd.f32 0.0, %v299
      %v301 = vpop.f32.mrb[0].mxu0
      %v302 = vpop.f32.mrb[0].mxu0
      %v303 = vadd.f32 0.0, %v302
      %v304 = vpop.f32.mrb[0].mxu0
      %305 = vmatprep.mubr.bf16.mxu0 0
      %306 = vmatmul.mubr.bf16.gmra.mrb[0].mxu0 %v253
      %v307 = vpop.f32.mrb[0].mxu0
      %v308 = vadd.f32 0.0, %v307
      %v309 = vpop.f32.mrb[0].mxu0
      %v310 = vpop.f32.mrb[0].mxu0
      %v311 = vadd.f32 0.0, %v310
      %v312 = vpop.f32.mrb[0].mxu0
      %313 = vmatprep.mubr.bf16.mxu0 0
      %314 = vmatmul.mubr.bf16.gmra.mrb[0].mxu0 %v256
      %v315 = vpop.f32.mrb[0].mxu0
      %v316 = vadd.f32 0.0, %v315
      %v317 = vpop.f32.mrb[0].mxu0
      %v318 = vpop.f32.mrb[0].mxu0
      %v319 = vadd.f32 0.0, %v318
      %v320 = vpop.f32.mrb[0].mxu0
      %321 = vmatprep.mubr.bf16.mxu0 0
      %322 = vmatmul.mubr.bf16.gmra.mrb[0].mxu0 %v259
      %v323 = vpop.f32.mrb[0].mxu0
      %v324 = vadd.f32 0.0, %v323
      %v325 = vpop.f32.mrb[0].mxu0
      %v326 = vpop.f32.mrb[0].mxu0
      %v327 = vadd.f32 0.0, %v326
      %v328 = vpop.f32.mrb[0].mxu0
      %329 = vdwg.mxu0
      %v330 = vpack.c.bf16 %v303, %v300
      %v331 = vpack.c.bf16 %v311, %v308
      %v332 = vpack.c.bf16 %v319, %v316
      %v333 = vpack.c.bf16 %v327, %v324
      %v338 = vunpack.c.l.b16 %v330
      %v339 = vunpack.c.h.b16 %v330
      %v340 = vunpack.c.l.b16 %v331
      %v341 = vunpack.c.h.b16 %v331
      %v342 = vunpack.c.l.b16 %v332
      %v343 = vunpack.c.h.b16 %v332
      %v344 = vunpack.c.l.b16 %v333
      %v345 = vunpack.c.h.b16 %v333
      %v346 = vpack.c.b16 %v338, %v338
      %v347 = vpack.c.b16 %v339, %v339
      %v348 = vpack.c.b16 %v340, %v340
      %v349 = vpack.c.b16 %v341, %v341
      %v350 = vpack.c.b16 %v342, %v342
      %v351 = vpack.c.b16 %v343, %v343
      %v352 = vpack.c.b16 %v344, %v344
      %v353 = vpack.c.b16 %v345, %v345
      %362 = vst [vmem:[%s210] sm:$0xf] %v346
      %363 = vst [vmem:[%s210 + $0x4] sm:$0xf] %v347
      %364 = vst [vmem:[%s210 + $0x8] sm:$0xf] %v348
      %365 = vst [vmem:[%s210 + $0xc] sm:$0xf] %v349
      %366 = vst [vmem:[%s210 + $0x10] sm:$0xf] %v350
      %367 = vst [vmem:[%s210 + $0x14] sm:$0xf] %v351
      %368 = vst [vmem:[%s210 + $0x18] sm:$0xf] %v352
      %369 = vst [vmem:[%s210 + $0x1c] sm:$0xf] %v353
      %v370 = vadd.f32 %v300, %v303
      %v371 = vadd.f32 %v370, %v308
      %v372 = vadd.f32 %v371, %v311
      %v373 = vadd.f32 %v372, %v316
      %v374 = vadd.f32 %v373, %v319
      %v375 = vadd.f32 %v374, %v324
      %v376 = vadd.f32 %v375, %v327
      %v377 = vrot.slane %v376, 4
      %v378 = vadd.f32 %v376, %v377
      %v379 = vrot.slane %v378, 2
      %v380 = vadd.f32 %v378, %v379
      %v381 = vrot.slane %v380, 1
      %v382 = vadd.f32 %v380, %v381
      %383 = vst [vmem:[%s214] sm:$0x1] %v382
      %v384 = vmul.f32 %v300, %v300
      %v385 = vmul.f32 %v303, %v303
      %v386 = vmul.f32 %v308, %v308
      %v387 = vmul.f32 %v311, %v311
      %v388 = vmul.f32 %v316, %v316
      %v389 = vmul.f32 %v319, %v319
      %v390 = vmul.f32 %v324, %v324
      %v391 = vmul.f32 %v327, %v327
      %v392 = vadd.f32 %v384, %v385
      %v393 = vadd.f32 %v392, %v386
      %v394 = vadd.f32 %v393, %v387
      %v395 = vadd.f32 %v394, %v388
      %v396 = vadd.f32 %v395, %v389
      %v397 = vadd.f32 %v396, %v390
      %v398 = vadd.f32 %v397, %v391
      %v399 = vrot.slane %v398, 4
      %v400 = vadd.f32 %v398, %v399
      %v401 = vrot.slane %v400, 2
      %v402 = vadd.f32 %v400, %v401
      %v403 = vrot.slane %v402, 1
      %v404 = vadd.f32 %v402, %v403
      %405 = vst [vmem:[%s217] sm:$0x1] %v404
      %s406 = smul.u32 8, %s16
      %p407 = scmp.lt.s32.totalorder %s406, 15
      %s408 = scalar_select %p407, %s406, 15
      %s409 = smul.addr %s408, 4
      %s410 = scalar_lea.vmem %s2, %s409
      %p411 = scmp.lt.s32.totalorder %s16, 1
      %s412 = scalar_select %p411, %s16, 1
      %s413 = scalar_lea.vmem %s3, %s412
      %p414 = scmp.lt.s32.totalorder %s16, 1
      %s415 = scalar_select %p414, %s16, 1
      %s416 = scalar_lea.vmem %s4, %s415
      // Predicated region
      $region29: #{basic_block_forward.8} parent=27 // pred_check
        %p417 = pneg %p81
      $region30: #{basic_block_forward.8} parent=27 // pred_check_branch
        %419 = sbr.rel (%p417) target = $region32
      $region31: #{basic_block_forward.8} parent=27 // pred_region
        %s420 = smul.u32 8, %s16
      $region32: #{basic_block_forward.8} parent=27 // pred_fallthru
        _
      // Predicated region
      $region33: #{basic_block_forward.8} parent=27 // pred_check
        %p421 = pneg %p107
      $region34: #{basic_block_forward.8} parent=27 // pred_check_branch
        %423 = sbr.rel (%p421) target = $region36
      $region35: #{basic_block_forward.8} parent=27 // pred_region
        _
      $region36: #{basic_block_forward.8} parent=27 // pred_fallthru
        _
      // Predicated region
      $region37: #{basic_block_forward.8} parent=27 // pred_check
        %p424 = pneg %p133
      $region38: #{basic_block_forward.8} parent=27 // pred_check_branch
        %426 = sbr.rel (%p424) target = $region40
      $region39: #{basic_block_forward.8} parent=27 // pred_region
        _
      $region40: #{basic_block_forward.8} parent=27 // pred_fallthru
        _
    $region28: #{basic_block_forward.8} parent=5 // pred_fallthru
      _
    %p427 = scmp.le.s32.totalorder 2, %s11
    // Predicated region
    $region41: #{basic_block_forward.8} parent=5 // pred_check
      %p428 = pneg %p427
    $region42: #{basic_block_forward.8} parent=5 // pred_check_branch
      %430 = sbr.rel (%p428) target = $region44
    $region43: #{basic_block_forward.8} parent=5 // pred_region
      %s431 = ssub.s32 %s11, 2
      // Predicated region
      $region45: #{basic_block_forward.8} parent=43 // pred_check
        %p432 = pneg %p87
      $region46: #{basic_block_forward.8} parent=43 // pred_check_branch
        %434 = sbr.rel (%p432) target = $region48
      $region47: #{basic_block_forward.8} parent=43 // pred_region
        %s435 = smul.u32 8, %s17
        %p436 = scmp.lt.s32.totalorder %s435, 15
        %s437 = scalar_select %p436, %s435, 15
        %s438 = smul.addr %s437, 4
        %s439 = scalar_lea.vmem %s2, %s438
      $region48: #{basic_block_forward.8} parent=43 // pred_fallthru
        _
      // Predicated region
      $region49: #{basic_block_forward.8} parent=43 // pred_check
        %p440 = pneg %p113
      $region50: #{basic_block_forward.8} parent=43 // pred_check_branch
        %442 = sbr.rel (%p440) target = $region52
      $region51: #{basic_block_forward.8} parent=43 // pred_region
        %p443 = scmp.lt.s32.totalorder %s17, 1
        %s444 = scalar_select %p443, %s17, 1
        %s445 = scalar_lea.vmem %s3, %s444
      $region52: #{basic_block_forward.8} parent=43 // pred_fallthru
        _
      // Predicated region
      $region53: #{basic_block_forward.8} parent=43 // pred_check
        %p446 = pneg %p139
      $region54: #{basic_block_forward.8} parent=43 // pred_check_branch
        %448 = sbr.rel (%p446) target = $region56
      $region55: #{basic_block_forward.8} parent=43 // pred_region
        %p449 = scmp.lt.s32.totalorder %s17, 1
        %s450 = scalar_select %p449, %s17, 1
        %s451 = scalar_lea.vmem %s4, %s450
      $region56: #{basic_block_forward.8} parent=43 // pred_fallthru
        _
    $region44: #{basic_block_forward.8} parent=5 // pred_fallthru
      _
  $region6: #{basic_block_forward.8} parent=0 // loop_footer
    %s15 = sadd.s32 1, %s11
  $region7: #{basic_block_forward.8} parent=0 // loop_footer_branch
    %10 = sbr.rel target = $region3
  $region8: #{basic_block_forward.8} parent=0 // loop_exit
    _

</llo_original>
